<compile_context>
chip_gen: v7x
topology: tpu7x:2x2x1
jax: 0.10.0
libtpu: 0.0.40
codegen_flags: <defaults>
</compile_context>

<pallas_src>
import functools

import jax
import jax.numpy as jnp
from jax import lax
from jax.experimental import pallas as pl
from jax.experimental.pallas import tpu as pltpu


def _softplus(h):
    # numerically stable softplus: max(h,0) + log1p(exp(-|h|))
    return jnp.maximum(h, 0.0) + jnp.log1p(jnp.exp(-jnp.abs(h)))


def _round_up(a, m):
    return (a + m - 1) // m * m


def ntm_forward_kernel(x_ref, eps_ref,
                       wh_ref, bh_ref,
                       wnorm_ref, bnorm_ref,
                       wt_ref, bt_ref,
                       out_ref, *, k_real, tv):
    f32 = jnp.float32
    bf16 = jnp.bfloat16

    tb, v = x_ref.shape
    n_sample = eps_ref.shape[0]
    kp = wt_ref.shape[0]

    x_f = x_ref[...]                                  # (TB, V) f32 (exact counts)
    x_b = x_f.astype(bf16)                            # bf16 MXU operand

    # hidden = Softplus(Linear(V, H))
    h = jnp.dot(x_b, wh_ref[...], preferred_element_type=f32) + bh_ref[...]
    h = _softplus(h)                                  # (TB, Hp) f32
    h_b = h.astype(bf16)

    # fused normal projection: [mu | log_sigma] in one (Hp, 2*Kp) matmul
    mls = jnp.dot(h_b, wnorm_ref[...], preferred_element_type=f32) + bnorm_ref[...]
    mu = mls[:, :kp]                                  # (TB, Kp)
    ls = mls[:, kp:]                                  # (TB, Kp)

    # kld_normal(mu, log_sigma); padded K columns contribute exactly 0
    kld = -0.5 * jnp.sum(1.0 - mu * mu + 2.0 * ls - jnp.exp(2.0 * ls),
                         axis=-1, keepdims=True)      # (TB, 1)

    sum_x = jnp.sum(x_f, axis=-1, keepdims=True)      # (TB, 1) f32 (exact)

    # z = softmax(eps * sigma + mu) for all samples at once: (n, TB, Kp)
    sigma = jnp.exp(ls)
    z = eps_ref[...] * sigma[None] + mu[None]
    if k_real < kp:
        col = lax.broadcasted_iota(jnp.int32, z.shape, 2)
        z = jnp.where(col >= k_real, -jnp.inf, z)     # mask padded topics
    zmax = jnp.max(z, axis=-1, keepdims=True)
    ez = jnp.exp(z - zmax)
    denom = jnp.sum(ez, axis=-1, keepdims=True)
    z = ez * pl.reciprocal(denom, approx=True)
    Z = z.reshape(n_sample * tb, kp).astype(bf16)     # (n*TB, Kp) bf16

    # --- streaming (online) logsumexp + rowsum(x*logits) over V chunks ------
    n_chunks = v // tv
    m = jnp.full((n_sample, tb, 1), -1e30, f32)       # running max
    s = jnp.zeros((n_sample, tb, 1), f32)             # running sum(exp)
    xl = jnp.zeros((n_sample, tb, 1), f32)            # running rowsum(x*logits)
    for c in range(n_chunks):                         # static unroll
        lo = c * tv
        logits = jnp.dot(Z, wt_ref[:, lo:lo + tv],
                         preferred_element_type=f32) + bt_ref[:, lo:lo + tv]
        l3 = logits.reshape(n_sample, tb, tv)         # (n, TB, TV)
        m_new = jnp.maximum(m, jnp.max(l3, axis=-1, keepdims=True))
        s = s * jnp.exp(m - m_new) + jnp.sum(jnp.exp(l3 - m_new),
                                             axis=-1, keepdims=True)
        m = m_new
        xl = xl + jnp.sum(x_f[:, lo:lo + tv][None] * l3, axis=-1, keepdims=True)

    lse = m + jnp.log(s)                              # (n, TB, 1)
    # sum_v x_v * log_softmax(logits)_v = rowsum(x*logits) - lse * sum_x
    rec = -jnp.sum(xl - lse * sum_x[None], axis=0) * (1.0 / n_sample)  # (TB,1)

    out_ref[:, 0:1] = rec
    out_ref[:, 1:2] = kld


def prepare_ntm_params(wh, bh, wmu, bmu, wls, bls, wt, bt):
    """Pad / cast / fuse weights ONCE (hoisted out of the per-call forward)."""
    V, H = wh.shape
    K = wmu.shape[1]
    assert V % 128 == 0, "vocab size must be a multiple of 128"
    Hp = _round_up(H, 128)
    Kp = _round_up(K, 128)
    f32, bf16 = jnp.float32, jnp.bfloat16

    def pad2(a, r, c):
        a = jnp.asarray(a)
        return jnp.pad(a, ((0, r - a.shape[0]), (0, c - a.shape[1])))

    wh_p = pad2(wh, V, Hp).astype(bf16)                               # (V, Hp)
    bh_p = pad2(jnp.asarray(bh).reshape(1, -1), 1, Hp).astype(f32)    # (1, Hp)
    wnorm_p = jnp.concatenate([pad2(wmu, Hp, Kp), pad2(wls, Hp, Kp)],
                              axis=1).astype(bf16)                    # (Hp, 2Kp)
    bnorm_p = jnp.concatenate([pad2(jnp.asarray(bmu).reshape(1, -1), 1, Kp),
                               pad2(jnp.asarray(bls).reshape(1, -1), 1, Kp)],
                              axis=1).astype(f32)                     # (1, 2Kp)
    wt_p = pad2(wt, Kp, V).astype(bf16)                               # (Kp, V)
    bt_p = jnp.asarray(bt).reshape(1, -1).astype(f32)                 # (1, V)
    params = (wh_p, bh_p, wnorm_p, bnorm_p, wt_p, bt_p)
    return params, K


@functools.partial(jax.jit, static_argnames=("k_real", "tb", "tv"))
def ntm_forward(x, eps, params, *, k_real, tb=None, tv=None):
    wh_p, bh_p, wnorm_p, bnorm_p, wt_p, bt_p = params
    B, V = x.shape
    n_sample = eps.shape[0]
    Hp = wh_p.shape[1]
    Kp = wt_p.shape[0]

    # Batch tile: aim for >= 4 grid steps (>= 2 per TC on v7x megacore).
    # On v5e/v6e with large B, passing tb=256..512 amortizes per-step overhead.
    if tb is None:
        tb = min(256, max(16, _round_up(pl.cdiv(B, 4), 16)))
    TB = tb
    Bp = _round_up(B, TB)

    if tv is None:
        # largest multiple-of-128 divisor of V that is <= 2048
        nv = V // 128
        best = 1
        for c in range(1, min(nv, 16) + 1):
            if nv % c == 0:
                best = c
        tv = best * 128
    assert V % tv == 0

    f32 = jnp.float32
    # x stays f32 (exact counts for the reduction terms); cast to bf16 in-kernel
    # only for the MXU operand.
    x_p = jnp.pad(x.astype(f32), ((0, Bp - B), (0, 0)))
    eps_p = jnp.pad(eps.astype(f32),
                    ((0, 0), (0, Bp - B), (0, Kp - eps.shape[2])))

    kernel = functools.partial(ntm_forward_kernel, k_real=k_real, tv=tv)

    def full(shape):
        zeros = (0,) * len(shape)
        return pl.BlockSpec(shape, lambda i, z=zeros: z)

    # cost estimate (helps XLA overlap the surrounding pad/slice/add ops)
    weight_bytes = (V * Hp * 2 + Hp * 2 * Kp * 2 + Kp * V * 2
                    + (Hp + 2 * Kp + V) * 4)
    flops = 2 * Bp * V * Hp + 2 * Bp * Hp * (2 * Kp) + 2 * n_sample * Bp * Kp * V
    transcend = n_sample * Bp * (V + 3 * Kp) + Bp * (Hp + 2 * Kp)
    bytes_acc = Bp * V * 4 + n_sample * Bp * Kp * 4 + Bp * 2 * 4 + weight_bytes

    # scoped-VMEM limit sized from the actual buffer budget (double-buffered
    # streams + resident weights + in-flight intermediates), capped at 64 MiB
    # so it remains valid on v7x.
    stream_bytes = 2 * (TB * V * 4 + n_sample * TB * Kp * 4 + TB * 2 * 4)
    inter_bytes = (TB * V * 2 + 2 * TB * Hp * 4 + TB * 2 * Kp * 4
                   + 5 * n_sample * TB * Kp * 4
                   + 4 * n_sample * TB * tv * 4)
    vmem_limit = int(min(max(2 * weight_bytes + stream_bytes + inter_bytes
                             + (4 << 20), 32 << 20), 64 << 20))

    out = pl.pallas_call(
        kernel,
        out_shape=jax.ShapeDtypeStruct((Bp, 2), f32),
        grid=(Bp // TB,),
        in_specs=[
            pl.BlockSpec((TB, V), lambda i: (i, 0)),                 # x (f32)
            pl.BlockSpec((n_sample, TB, Kp), lambda i: (0, i, 0)),   # eps
            full((V, Hp)), full((1, Hp)),                            # hidden
            full((Hp, 2 * Kp)), full((1, 2 * Kp)),                   # fused mu|ls
            full((Kp, V)), full((1, V)),                             # topics
        ],
        out_specs=pl.BlockSpec((TB, 2), lambda i: (i, 0)),           # [rec|kld]
        compiler_params=pltpu.CompilerParams(
            dimension_semantics=("parallel",),
            vmem_limit_bytes=vmem_limit,
        ),
        cost_estimate=pl.CostEstimate(
            flops=int(flops),
            transcendentals=int(transcend),
            bytes_accessed=int(bytes_acc)),
    )(x_p, eps_p, wh_p, bh_p, wnorm_p, bnorm_p, wt_p, bt_p)

    rec = out[:B, 0]
    kld = out[:B, 1]
    elbo = rec + kld
    return {'loss': elbo, 'minus_elbo': elbo, 'rec_loss': rec, 'kld': kld}


def ntm_forward_ref(x, eps, wh, bh, wmu, bmu, wls, bls, wt, bt):
    # plain-JAX reference (same math as the PyTorch module), with bf16 matmul
    # operands / f32 accumulation to match the kernel's dtype policy.
    def mm(a, b):
        return jnp.dot(a.astype(jnp.bfloat16), b.astype(jnp.bfloat16),
                       preferred_element_type=jnp.float32)

    h = jax.nn.softplus(mm(x, wh) + bh)
    mu = mm(h, wmu) + bmu
    ls = mm(h, wls) + bls
    kld = -0.5 * jnp.sum(1.0 - mu ** 2 + 2.0 * ls - jnp.exp(2.0 * ls), axis=-1)
    n_sample = eps.shape[0]
    rec = 0.0
    for i in range(n_sample):
        z = eps[i] * jnp.exp(ls) + mu
        z = jax.nn.softmax(z, axis=-1)
        log_prob = jax.nn.log_softmax(mm(z, wt) + bt, axis=-1)
        rec = rec - jnp.sum(log_prob * x, axis=-1)
    rec = rec / n_sample
    return rec + kld, rec, kld


def _linear_init(key, fan_in, fan_out):
    # PyTorch-Linear-style U(-1/sqrt(fan_in), 1/sqrt(fan_in)), weights stored
    # transposed relative to torch, i.e. (in_features, out_features).
    kw, kb = jax.random.split(key)
    bound = 1.0 / jnp.sqrt(float(fan_in))
    w = jax.random.uniform(kw, (fan_in, fan_out), jnp.float32, -bound, bound)
    b = jax.random.uniform(kb, (1, fan_out), jnp.float32, -bound, bound)
    return w, b


if __name__ == "__main__":
    B, V, H, K = 256, 256, 64, 16      # batch, vocab, hidden, num_topics
    n_sample = 2

    key = jax.random.PRNGKey(0)
    kx, keps, k1, k2, k3, k4 = jax.random.split(key, 6)

    # bag-of-words style input (non-negative counts as float32)
    x = jax.random.poisson(kx, 0.5, (B, V)).astype(jnp.float32)
    eps = jax.random.normal(keps, (n_sample, B, K), jnp.float32)

    wh, bh = _linear_init(k1, V, H)      # hidden
    wmu, bmu = _linear_init(k2, H, K)    # normal.mu
    wls, bls = _linear_init(k3, H, K)    # normal.log_sigma
    wt, bt = _linear_init(k4, K, V)      # topics

    # weight prep (pad / bf16-cast / fuse) happens once, outside the forward
    params, k_real = prepare_ntm_params(wh, bh, wmu, bmu, wls, bls, wt, bt)

    out = ntm_forward(x, eps, params, k_real=k_real)
    jax.block_until_ready(out)

    elbo_r, rec_r, kld_r = ntm_forward_ref(x, eps, wh, bh, wmu, bmu, wls, bls,
                                           wt, bt)
    assert jnp.allclose(out['minus_elbo'], elbo_r, rtol=1e-2, atol=1e-1)
    assert jnp.allclose(out['rec_loss'], rec_r, rtol=1e-2, atol=1e-1)
    assert jnp.allclose(out['kld'], kld_r, rtol=1e-2, atol=1e-1)

    print("KERNEL_OK")
</pallas_src>

<mosaic_0001>
module attributes {stable_mosaic.version = 11 : i64} {
  func.func @ntm_forward_kernel(%arg0: i32, %arg1: memref<64x256xf32, #tpu.memory_space<vmem>>, %arg2: memref<2x64x128xf32, #tpu.memory_space<vmem>>, %arg3: memref<256x128xbf16, #tpu.memory_space<vmem>>, %arg4: memref<1x128xf32, #tpu.memory_space<vmem>>, %arg5: memref<128x256xbf16, #tpu.memory_space<vmem>>, %arg6: memref<1x256xf32, #tpu.memory_space<vmem>>, %arg7: memref<128x256xbf16, #tpu.memory_space<vmem>>, %arg8: memref<1x256xf32, #tpu.memory_space<vmem>>, %arg9: memref<64x2xf32, #tpu.memory_space<vmem>>) attributes {dimension_semantics = [#tpu.dimension_semantics<parallel>], iteration_bounds = array<i64: 4>, scalar_prefetch = 0 : i64, scratch_operands = 0 : i64, tpu.core_type = #tpu.core_type<tc>, window_params = [{transform_indices = @transform_0, window_bounds = array<i64: 64, 256>}, {transform_indices = @transform_1, window_bounds = array<i64: 2, 64, 128>}, {pipeline_mode = #tpu.pipeline_mode<synchronous>, transform_indices = @transform_2, window_bounds = array<i64: 256, 128>}, {pipeline_mode = #tpu.pipeline_mode<synchronous>, transform_indices = @transform_3, window_bounds = array<i64: 1, 128>}, {pipeline_mode = #tpu.pipeline_mode<synchronous>, transform_indices = @transform_4, window_bounds = array<i64: 128, 256>}, {pipeline_mode = #tpu.pipeline_mode<synchronous>, transform_indices = @transform_5, window_bounds = array<i64: 1, 256>}, {pipeline_mode = #tpu.pipeline_mode<synchronous>, transform_indices = @transform_6, window_bounds = array<i64: 128, 256>}, {pipeline_mode = #tpu.pipeline_mode<synchronous>, transform_indices = @transform_7, window_bounds = array<i64: 1, 256>}, {transform_indices = @transform_8, window_bounds = array<i64: 64, 2>}]} {
    %c0 = arith.constant 0 : index
    %c0_0 = arith.constant 0 : index
    %0 = vector.load %arg1[%c0, %c0_0] : memref<64x256xf32, #tpu.memory_space<vmem>>, vector<64x256xf32>
    %1 = arith.truncf %0 : vector<64x256xf32> to vector<64x256xbf16>
    %c0_1 = arith.constant 0 : index
    %c0_2 = arith.constant 0 : index
    %2 = vector.load %arg3[%c0_1, %c0_2] : memref<256x128xbf16, #tpu.memory_space<vmem>>, vector<256x128xbf16>
    %cst = arith.constant dense<0.000000e+00> : vector<64x128xf32>
    %3 = tpu.matmul %1, %2, %cst {dimension_numbers = #tpu.dot_dimension_numbers<[1], [0], [0], [1], [0, 0, 1, 1], [], []>} : vector<64x256xbf16>, vector<256x128xbf16>, vector<64x128xf32> -> vector<64x128xf32>
    %c0_3 = arith.constant 0 : index
    %c0_4 = arith.constant 0 : index
    %4 = vector.load %arg4[%c0_3, %c0_4] : memref<1x128xf32, #tpu.memory_space<vmem>>, vector<1x128xf32>
    %5 = vector.broadcast %4 : vector<1x128xf32> to vector<64x128xf32>
    %6 = arith.addf %3, %5 : vector<64x128xf32>
    %cst_5 = arith.constant 0.000000e+00 : f32
    %7 = vector.broadcast %cst_5 : f32 to vector<64x128xf32>
    %8 = arith.maximumf %6, %7 : vector<64x128xf32>
    %9 = math.absf %6 : vector<64x128xf32>
    %cst_6 = arith.constant 0.000000e+00 : f32
    %10 = vector.broadcast %cst_6 : f32 to vector<64x128xf32>
    %11 = arith.subf %10, %9 : vector<64x128xf32>
    %12 = math.exp %11 : vector<64x128xf32>
    %13 = math.log1p %12 : vector<64x128xf32>
    %14 = arith.addf %8, %13 : vector<64x128xf32>
    %15 = arith.truncf %14 : vector<64x128xf32> to vector<64x128xbf16>
    %c0_7 = arith.constant 0 : index
    %c0_8 = arith.constant 0 : index
    %16 = vector.load %arg5[%c0_7, %c0_8] : memref<128x256xbf16, #tpu.memory_space<vmem>>, vector<128x256xbf16>
    %cst_9 = arith.constant dense<0.000000e+00> : vector<64x256xf32>
    %17 = tpu.matmul %15, %16, %cst_9 {dimension_numbers = #tpu.dot_dimension_numbers<[1], [0], [0], [1], [0, 0, 1, 1], [], []>} : vector<64x128xbf16>, vector<128x256xbf16>, vector<64x256xf32> -> vector<64x256xf32>
    %c0_10 = arith.constant 0 : index
    %c0_11 = arith.constant 0 : index
    %18 = vector.load %arg6[%c0_10, %c0_11] : memref<1x256xf32, #tpu.memory_space<vmem>>, vector<1x256xf32>
    %19 = vector.broadcast %18 : vector<1x256xf32> to vector<64x256xf32>
    %20 = arith.addf %17, %19 : vector<64x256xf32>
    %21 = vector.extract_strided_slice %20 {offsets = [0, 0], sizes = [64, 128], strides = [1, 1]} : vector<64x256xf32> to vector<64x128xf32>
    %22 = vector.extract_strided_slice %20 {offsets = [0, 128], sizes = [64, 128], strides = [1, 1]} : vector<64x256xf32> to vector<64x128xf32>
    %23 = arith.mulf %21, %21 : vector<64x128xf32>
    %cst_12 = arith.constant 1.000000e+00 : f32
    %24 = vector.broadcast %cst_12 : f32 to vector<64x128xf32>
    %25 = arith.subf %24, %23 : vector<64x128xf32>
    %cst_13 = arith.constant 2.000000e+00 : f32
    %26 = vector.broadcast %cst_13 : f32 to vector<64x128xf32>
    %27 = arith.mulf %26, %22 : vector<64x128xf32>
    %28 = arith.addf %25, %27 : vector<64x128xf32>
    %cst_14 = arith.constant 2.000000e+00 : f32
    %29 = vector.broadcast %cst_14 : f32 to vector<64x128xf32>
    %30 = arith.mulf %29, %22 : vector<64x128xf32>
    %31 = math.exp %30 : vector<64x128xf32>
    %32 = arith.subf %28, %31 : vector<64x128xf32>
    %cst_15 = arith.constant dense<0.000000e+00> : vector<64xf32>
    %33 = vector.multi_reduction <add>, %32, %cst_15 [1] : vector<64x128xf32> to vector<64xf32>
    %34 = vector.shape_cast %33 : vector<64xf32> to vector<64x1xf32>
    %cst_16 = arith.constant -5.000000e-01 : f32
    %35 = vector.broadcast %cst_16 : f32 to vector<64x1xf32>
    %36 = arith.mulf %35, %34 : vector<64x1xf32>
    %cst_17 = arith.constant dense<0.000000e+00> : vector<64xf32>
    %37 = vector.multi_reduction <add>, %0, %cst_17 [1] : vector<64x256xf32> to vector<64xf32>
    %38 = vector.shape_cast %37 : vector<64xf32> to vector<64x1xf32>
    %39 = math.exp %22 : vector<64x128xf32>
    %c0_18 = arith.constant 0 : index
    %c0_19 = arith.constant 0 : index
    %c0_20 = arith.constant 0 : index
    %40 = vector.load %arg2[%c0_18, %c0_19, %c0_20] : memref<2x64x128xf32, #tpu.memory_space<vmem>>, vector<2x64x128xf32>
    %41 = vector.shape_cast %39 : vector<64x128xf32> to vector<1x64x128xf32>
    %42 = vector.broadcast %41 : vector<1x64x128xf32> to vector<2x64x128xf32>
    %43 = arith.mulf %40, %42 : vector<2x64x128xf32>
    %44 = vector.shape_cast %21 : vector<64x128xf32> to vector<1x64x128xf32>
    %45 = vector.broadcast %44 : vector<1x64x128xf32> to vector<2x64x128xf32>
    %46 = arith.addf %43, %45 : vector<2x64x128xf32>
    %47 = tpu.iota {dimensions = array<i32: 2>} : vector<2x64x128xi32>
    %c16_i32 = arith.constant 16 : i32
    %48 = vector.broadcast %c16_i32 : i32 to vector<2x64x128xi32>
    %49 = arith.cmpi sge, %47, %48 : vector<2x64x128xi32>
    %cst_21 = arith.constant 0xFF800000 : f32
    %50 = vector.broadcast %cst_21 : f32 to vector<2x64x128xf32>
    %51 = arith.select %49, %50, %46 : vector<2x64x128xi1>, vector<2x64x128xf32>
    %cst_22 = arith.constant dense<0xFF800000> : vector<2x64xf32>
    %52 = vector.multi_reduction <maximumf>, %51, %cst_22 [2] : vector<2x64x128xf32> to vector<2x64xf32>
    %53 = vector.shape_cast %52 : vector<2x64xf32> to vector<2x64x1xf32>
    %54 = vector.broadcast %53 : vector<2x64x1xf32> to vector<2x64x128xf32>
    %55 = arith.subf %51, %54 : vector<2x64x128xf32>
    %56 = math.exp %55 : vector<2x64x128xf32>
    %cst_23 = arith.constant dense<0.000000e+00> : vector<2x64xf32>
    %57 = vector.multi_reduction <add>, %56, %cst_23 [2] : vector<2x64x128xf32> to vector<2x64xf32>
    %58 = vector.shape_cast %57 : vector<2x64xf32> to vector<2x64x1xf32>
    %59 = tpu.reciprocal %58 {approx = true} : vector<2x64x1xf32> -> vector<2x64x1xf32>
    %60 = vector.broadcast %59 : vector<2x64x1xf32> to vector<2x64x128xf32>
    %61 = arith.mulf %56, %60 : vector<2x64x128xf32>
    %62 = vector.shape_cast %61 : vector<2x64x128xf32> to vector<128x128xf32>
    %63 = arith.truncf %62 : vector<128x128xf32> to vector<128x128xbf16>
    %cst_24 = arith.constant -1.000000e+30 : f32
    %64 = vector.broadcast %cst_24 : f32 to vector<2x64x1xf32>
    %cst_25 = arith.constant 0.000000e+00 : f32
    %65 = vector.broadcast %cst_25 : f32 to vector<2x64x1xf32>
    %cst_26 = arith.constant 0.000000e+00 : f32
    %66 = vector.broadcast %cst_26 : f32 to vector<2x64x1xf32>
    %c0_27 = arith.constant 0 : index
    %c0_28 = arith.constant 0 : index
    %67 = vector.load %arg7[%c0_27, %c0_28] : memref<128x256xbf16, #tpu.memory_space<vmem>>, vector<128x256xbf16>
    %cst_29 = arith.constant dense<0.000000e+00> : vector<128x256xf32>
    %68 = tpu.matmul %63, %67, %cst_29 {dimension_numbers = #tpu.dot_dimension_numbers<[1], [0], [0], [1], [0, 0, 1, 1], [], []>} : vector<128x128xbf16>, vector<128x256xbf16>, vector<128x256xf32> -> vector<128x256xf32>
    %c0_30 = arith.constant 0 : index
    %c0_31 = arith.constant 0 : index
    %69 = vector.load %arg8[%c0_30, %c0_31] : memref<1x256xf32, #tpu.memory_space<vmem>>, vector<1x256xf32>
    %70 = vector.broadcast %69 : vector<1x256xf32> to vector<128x256xf32>
    %71 = arith.addf %68, %70 : vector<128x256xf32>
    %72 = vector.shape_cast %71 : vector<128x256xf32> to vector<2x64x256xf32>
    %cst_32 = arith.constant dense<0xFF800000> : vector<2x64xf32>
    %73 = vector.multi_reduction <maximumf>, %72, %cst_32 [2] : vector<2x64x256xf32> to vector<2x64xf32>
    %74 = vector.shape_cast %73 : vector<2x64xf32> to vector<2x64x1xf32>
    %75 = arith.maximumf %64, %74 : vector<2x64x1xf32>
    %76 = arith.subf %64, %75 : vector<2x64x1xf32>
    %77 = math.exp %76 : vector<2x64x1xf32>
    %78 = arith.mulf %65, %77 : vector<2x64x1xf32>
    %79 = vector.broadcast %75 : vector<2x64x1xf32> to vector<2x64x256xf32>
    %80 = arith.subf %72, %79 : vector<2x64x256xf32>
    %81 = math.exp %80 : vector<2x64x256xf32>
    %cst_33 = arith.constant dense<0.000000e+00> : vector<2x64xf32>
    %82 = vector.multi_reduction <add>, %81, %cst_33 [2] : vector<2x64x256xf32> to vector<2x64xf32>
    %83 = vector.shape_cast %82 : vector<2x64xf32> to vector<2x64x1xf32>
    %84 = arith.addf %78, %83 : vector<2x64x1xf32>
    %85 = vector.shape_cast %0 : vector<64x256xf32> to vector<1x64x256xf32>
    %86 = vector.broadcast %85 : vector<1x64x256xf32> to vector<2x64x256xf32>
    %87 = arith.mulf %86, %72 : vector<2x64x256xf32>
    %cst_34 = arith.constant dense<0.000000e+00> : vector<2x64xf32>
    %88 = vector.multi_reduction <add>, %87, %cst_34 [2] : vector<2x64x256xf32> to vector<2x64xf32>
    %89 = vector.shape_cast %88 : vector<2x64xf32> to vector<2x64x1xf32>
    %90 = arith.addf %66, %89 : vector<2x64x1xf32>
    %91 = math.log %84 : vector<2x64x1xf32>
    %92 = arith.addf %75, %91 : vector<2x64x1xf32>
    %93 = vector.shape_cast %38 : vector<64x1xf32> to vector<1x64x1xf32>
    %94 = vector.broadcast %93 : vector<1x64x1xf32> to vector<2x64x1xf32>
    %95 = arith.mulf %92, %94 : vector<2x64x1xf32>
    %96 = arith.subf %90, %95 : vector<2x64x1xf32>
    %cst_35 = arith.constant dense<0.000000e+00> : vector<64x1xf32>
    %97 = vector.multi_reduction <add>, %96, %cst_35 [0] : vector<2x64x1xf32> to vector<64x1xf32>
    %cst_36 = arith.constant 0.000000e+00 : f32
    %98 = vector.broadcast %cst_36 : f32 to vector<64x1xf32>
    %99 = arith.subf %98, %97 : vector<64x1xf32>
    %cst_37 = arith.constant 5.000000e-01 : f32
    %100 = vector.broadcast %cst_37 : f32 to vector<64x1xf32>
    %101 = arith.mulf %99, %100 : vector<64x1xf32>
    %c0_38 = arith.constant 0 : index
    %c0_39 = arith.constant 0 : index
    %102 = vector.load %arg9[%c0_38, %c0_39] : memref<64x2xf32, #tpu.memory_space<vmem>>, vector<64x1xf32>
    tpu.vector_store %arg9[%c0_38, %c0_39], %101 {strides = array<i32>} : memref<64x2xf32, #tpu.memory_space<vmem>>, vector<64x1xf32>,
    %c0_40 = arith.constant 0 : index
    %c1 = arith.constant 1 : index
    %103 = vector.load %arg9[%c0_40, %c1] : memref<64x2xf32, #tpu.memory_space<vmem>>, vector<64x1xf32>
    tpu.vector_store %arg9[%c0_40, %c1], %36 {strides = array<i32>} : memref<64x2xf32, #tpu.memory_space<vmem>>, vector<64x1xf32>,
    return
  }
  func.func @transform_0(%arg0: i32) -> (i32, i32) {
    %c0_i32 = arith.constant 0 : i32
    %c0_i32_0 = arith.constant 0 : i32
    return %arg0, %c0_i32 : i32, i32
  }
  func.func @transform_1(%arg0: i32) -> (i32, i32, i32) {
    %c0_i32 = arith.constant 0 : i32
    %c0_i32_0 = arith.constant 0 : i32
    %c0_i32_1 = arith.constant 0 : i32
    return %c0_i32, %arg0, %c0_i32_0 : i32, i32, i32
  }
  func.func @transform_2(%arg0: i32) -> (i32, i32) {
    %c0_i32 = arith.constant 0 : i32
    %c0_i32_0 = arith.constant 0 : i32
    %c0_i32_1 = arith.constant 0 : i32
    return %c0_i32, %c0_i32_0 : i32, i32
  }
  func.func @transform_3(%arg0: i32) -> (i32, i32) {
    %c0_i32 = arith.constant 0 : i32
    %c0_i32_0 = arith.constant 0 : i32
    %c0_i32_1 = arith.constant 0 : i32
    return %c0_i32, %c0_i32_0 : i32, i32
  }
  func.func @transform_4(%arg0: i32) -> (i32, i32) {
    %c0_i32 = arith.constant 0 : i32
    %c0_i32_0 = arith.constant 0 : i32
    %c0_i32_1 = arith.constant 0 : i32
    return %c0_i32, %c0_i32_0 : i32, i32
  }
  func.func @transform_5(%arg0: i32) -> (i32, i32) {
    %c0_i32 = arith.constant 0 : i32
    %c0_i32_0 = arith.constant 0 : i32
    %c0_i32_1 = arith.constant 0 : i32
    return %c0_i32, %c0_i32_0 : i32, i32
  }
  func.func @transform_6(%arg0: i32) -> (i32, i32) {
    %c0_i32 = arith.constant 0 : i32
    %c0_i32_0 = arith.constant 0 : i32
    %c0_i32_1 = arith.constant 0 : i32
    return %c0_i32, %c0_i32_0 : i32, i32
  }
  func.func @transform_7(%arg0: i32) -> (i32, i32) {
    %c0_i32 = arith.constant 0 : i32
    %c0_i32_0 = arith.constant 0 : i32
    %c0_i32_1 = arith.constant 0 : i32
    return %c0_i32, %c0_i32_0 : i32, i32
  }
  func.func @transform_8(%arg0: i32) -> (i32, i32) {
    %c0_i32 = arith.constant 0 : i32
    %c0_i32_0 = arith.constant 0 : i32
    return %arg0, %c0_i32 : i32, i32
  }
}

</mosaic_0001>

<llo_original>
// kernel: ntm_forward.1
$region0: #{ntm_forward.1}
  #allocation0 [shape = 'u32[]', space=smem, size = 0x4, offset = 0x4, fixed_abs, tag = 'smem constant byte address 0x4 - core index']
  #allocation1 [shape = 'u32[144,128]{1,0:T(1,128)}', space=vmem, size = 0x12000, scoped, tag = 'internal scratch']
  %s0 = inlined_call_operand.vmem [shape: f32[256,256], index: 0, kind: input, shape index: {}]
  %s1 = inlined_call_operand.vmem [shape: f32[2,256,128], index: 1, kind: input, shape index: {}]
  %s2 = inlined_call_operand.vmem [shape: bf16[256,128], index: 2, kind: input, shape index: {}]
  %s3 = inlined_call_operand.vmem [shape: f32[1,128], index: 3, kind: input, shape index: {}]
  %s4 = inlined_call_operand.vmem [shape: bf16[128,256], index: 4, kind: input, shape index: {}]
  %s5 = inlined_call_operand.vmem [shape: f32[1,256], index: 5, kind: input, shape index: {}]
  %s6 = inlined_call_operand.vmem [shape: bf16[128,256], index: 6, kind: input, shape index: {}]
  %s7 = inlined_call_operand.vmem [shape: f32[1,256], index: 7, kind: input, shape index: {}]
  %s8 = inlined_call_operand.vmem [shape: f32[256,2], index: 8, kind: output, shape index: {}]
  %s9 = sld [smem:[#allocation0]]
  $region103: #{ntm_forward.1} parent=0
    _
  %s11 = ssub.s32 1, %s9
  %s12 = scalar_select 0, %s11, %s9
  $region1: #{ntm_forward.1} parent=0
    #allocation2 [shape = 'u8[131072]{0}', space=vmem, size = 0x20000, scoped, tag = 'input window, operand 1']
    loop: start=0, step=1, limit=6
    $region2: #{ntm_forward.1} parent=1 // loop_pre_header
      _
    $region3: #{ntm_forward.1} parent=1 // loop_header
      %s14 = sphi 0, %s18
      %p15 = scmp.ge.s32.totalorder %s14, 6
      %s24 = sphi 0, %s26
      %s27 = sphi 0, %s24
      %s28 = sphi 0, %s27
      %s44 = sphi 0, %s28
      %s50 = sphi 0, %s52
      %s53 = sphi 0, %s50
      %s54 = sphi 0, %s53
      %s70 = sphi 0, %s54
      %s74 = sphi 0, %s74
      %s76 = sphi 0, %s74
      %s77 = sphi 0, %s76
      %s91 = sphi 0, %s77
      %s95 = sphi 0, %s95
      %s97 = sphi 0, %s95
      %s98 = sphi 0, %s97
      %s112 = sphi 0, %s98
      %s116 = sphi 0, %s116
      %s118 = sphi 0, %s116
      %s119 = sphi 0, %s118
      %s133 = sphi 0, %s119
      %s137 = sphi 0, %s137
      %s139 = sphi 0, %s137
      %s140 = sphi 0, %s139
      %s154 = sphi 0, %s140
      %s158 = sphi 0, %s158
      %s160 = sphi 0, %s158
      %s161 = sphi 0, %s160
      %s175 = sphi 0, %s161
      %s179 = sphi 0, %s179
      %s181 = sphi 0, %s179
      %s182 = sphi 0, %s181
      %s196 = sphi 0, %s182
      %s202 = sphi 0, %s204
      %s205 = sphi 0, %s202
      %s206 = sphi 0, %s205
      %s222 = sphi 0, %s206
    $region4: #{ntm_forward.1} parent=1 // loop_header_branch
      %17 = sbr.rel (%p15) target = $region8
    $region5: #{ntm_forward.1} parent=1 // loop_body
      %s19 = ssub.s32 %s14, 1
      %s20 = ssub.s32 %s14, 2
      %s21 = sadd.s32 %s14, 1
      %s22 = ssub.s32 %s14, %s21
      %p23 = scmp.eq.s32.totalorder %s22, 0
      %s25 = sadd.s32 %s24, 1
      %s26 = scalar_select %p23, %s24, %s25
      %p29 = pneg %p23
      %p30 = scmp.eq.s32.totalorder %s14, 3
      %p31 = por %p29, %p30
      %p32 = scmp.ne.s32.totalorder %s24, %s27
      %p33 = scmp.eq.s32.totalorder %s14, 0
      %p34 = por %p32, %p33
      %p35 = scmp.ne.s32.totalorder %s24, %s27
      %p36 = scmp.eq.s32.totalorder %s19, 3
      %p37 = por %p35, %p36
      %p38 = scmp.ne.s32.totalorder %s27, %s28
      %p39 = scmp.eq.s32.totalorder %s19, 0
      %p40 = por %p38, %p39
      %p41 = scmp.ne.s32.totalorder %s27, %s28
      %p42 = scmp.eq.s32.totalorder %s20, 3
      %p43 = por %p41, %p42
      %p45 = scmp.ne.s32.totalorder %s28, %s44
      %p46 = scmp.eq.s32.totalorder %s20, 0
      %p47 = por %p45, %p46
      %s48 = ssub.s32 %s14, %s21
      %p49 = scmp.eq.s32.totalorder %s48, 0
      %s51 = sadd.s32 %s50, 1
      %s52 = scalar_select %p49, %s50, %s51
      %p55 = pneg %p49
      %p56 = scmp.eq.s32.totalorder %s14, 3
      %p57 = por %p55, %p56
      %p58 = scmp.ne.s32.totalorder %s50, %s53
      %p59 = scmp.eq.s32.totalorder %s14, 0
      %p60 = por %p58, %p59
      %p61 = scmp.ne.s32.totalorder %s50, %s53
      %p62 = scmp.eq.s32.totalorder %s19, 3
      %p63 = por %p61, %p62
      %p64 = scmp.ne.s32.totalorder %s53, %s54
      %p65 = scmp.eq.s32.totalorder %s19, 0
      %p66 = por %p64, %p65
      %p67 = scmp.ne.s32.totalorder %s53, %s54
      %p68 = scmp.eq.s32.totalorder %s20, 3
      %p69 = por %p67, %p68
      %p71 = scmp.ne.s32.totalorder %s54, %s70
      %p72 = scmp.eq.s32.totalorder %s20, 0
      %p73 = por %p71, %p72
      %s75 = sadd.s32 %s74, 1
      %p78 = scmp.eq.s32.totalorder %s14, 3
      %p79 = scmp.ne.s32.totalorder %s74, %s76
      %p80 = scmp.eq.s32.totalorder %s14, 0
      %p81 = por %p79, %p80
      %p82 = scmp.ne.s32.totalorder %s74, %s76
      %p83 = scmp.eq.s32.totalorder %s19, 3
      %p84 = por %p82, %p83
      %p85 = scmp.ne.s32.totalorder %s76, %s77
      %p86 = scmp.eq.s32.totalorder %s19, 0
      %p87 = por %p85, %p86
      %p88 = scmp.ne.s32.totalorder %s76, %s77
      %p89 = scmp.eq.s32.totalorder %s20, 3
      %p90 = por %p88, %p89
      %p92 = scmp.ne.s32.totalorder %s77, %s91
      %p93 = scmp.eq.s32.totalorder %s20, 0
      %p94 = por %p92, %p93
      %s96 = sadd.s32 %s95, 1
      %p99 = scmp.eq.s32.totalorder %s14, 3
      %p100 = scmp.ne.s32.totalorder %s95, %s97
      %p101 = scmp.eq.s32.totalorder %s14, 0
      %p102 = por %p100, %p101
      %p103 = scmp.ne.s32.totalorder %s95, %s97
      %p104 = scmp.eq.s32.totalorder %s19, 3
      %p105 = por %p103, %p104
      %p106 = scmp.ne.s32.totalorder %s97, %s98
      %p107 = scmp.eq.s32.totalorder %s19, 0
      %p108 = por %p106, %p107
      %p109 = scmp.ne.s32.totalorder %s97, %s98
      %p110 = scmp.eq.s32.totalorder %s20, 3
      %p111 = por %p109, %p110
      %p113 = scmp.ne.s32.totalorder %s98, %s112
      %p114 = scmp.eq.s32.totalorder %s20, 0
      %p115 = por %p113, %p114
      %s117 = sadd.s32 %s116, 1
      %p120 = scmp.eq.s32.totalorder %s14, 3
      %p121 = scmp.ne.s32.totalorder %s116, %s118
      %p122 = scmp.eq.s32.totalorder %s14, 0
      %p123 = por %p121, %p122
      %p124 = scmp.ne.s32.totalorder %s116, %s118
      %p125 = scmp.eq.s32.totalorder %s19, 3
      %p126 = por %p124, %p125
      %p127 = scmp.ne.s32.totalorder %s118, %s119
      %p128 = scmp.eq.s32.totalorder %s19, 0
      %p129 = por %p127, %p128
      %p130 = scmp.ne.s32.totalorder %s118, %s119
      %p131 = scmp.eq.s32.totalorder %s20, 3
      %p132 = por %p130, %p131
      %p134 = scmp.ne.s32.totalorder %s119, %s133
      %p135 = scmp.eq.s32.totalorder %s20, 0
      %p136 = por %p134, %p135
      %s138 = sadd.s32 %s137, 1
      %p141 = scmp.eq.s32.totalorder %s14, 3
      %p142 = scmp.ne.s32.totalorder %s137, %s139
      %p143 = scmp.eq.s32.totalorder %s14, 0
      %p144 = por %p142, %p143
      %p145 = scmp.ne.s32.totalorder %s137, %s139
      %p146 = scmp.eq.s32.totalorder %s19, 3
      %p147 = por %p145, %p146
      %p148 = scmp.ne.s32.totalorder %s139, %s140
      %p149 = scmp.eq.s32.totalorder %s19, 0
      %p150 = por %p148, %p149
      %p151 = scmp.ne.s32.totalorder %s139, %s140
      %p152 = scmp.eq.s32.totalorder %s20, 3
      %p153 = por %p151, %p152
      %p155 = scmp.ne.s32.totalorder %s140, %s154
      %p156 = scmp.eq.s32.totalorder %s20, 0
      %p157 = por %p155, %p156
      %s159 = sadd.s32 %s158, 1
      %p162 = scmp.eq.s32.totalorder %s14, 3
      %p163 = scmp.ne.s32.totalorder %s158, %s160
      %p164 = scmp.eq.s32.totalorder %s14, 0
      %p165 = por %p163, %p164
      %p166 = scmp.ne.s32.totalorder %s158, %s160
      %p167 = scmp.eq.s32.totalorder %s19, 3
      %p168 = por %p166, %p167
      %p169 = scmp.ne.s32.totalorder %s160, %s161
      %p170 = scmp.eq.s32.totalorder %s19, 0
      %p171 = por %p169, %p170
      %p172 = scmp.ne.s32.totalorder %s160, %s161
      %p173 = scmp.eq.s32.totalorder %s20, 3
      %p174 = por %p172, %p173
      %p176 = scmp.ne.s32.totalorder %s161, %s175
      %p177 = scmp.eq.s32.totalorder %s20, 0
      %p178 = por %p176, %p177
      %s180 = sadd.s32 %s179, 1
      %p183 = scmp.eq.s32.totalorder %s14, 3
      %p184 = scmp.ne.s32.totalorder %s179, %s181
      %p185 = scmp.eq.s32.totalorder %s14, 0
      %p186 = por %p184, %p185
      %p187 = scmp.ne.s32.totalorder %s179, %s181
      %p188 = scmp.eq.s32.totalorder %s19, 3
      %p189 = por %p187, %p188
      %p190 = scmp.ne.s32.totalorder %s181, %s182
      %p191 = scmp.eq.s32.totalorder %s19, 0
      %p192 = por %p190, %p191
      %p193 = scmp.ne.s32.totalorder %s181, %s182
      %p194 = scmp.eq.s32.totalorder %s20, 3
      %p195 = por %p193, %p194
      %p197 = scmp.ne.s32.totalorder %s182, %s196
      %p198 = scmp.eq.s32.totalorder %s20, 0
      %p199 = por %p197, %p198
      %s200 = ssub.s32 %s14, %s21
      %p201 = scmp.eq.s32.totalorder %s200, 0
      %s203 = sadd.s32 %s202, 1
      %s204 = scalar_select %p201, %s202, %s203
      %p207 = pneg %p201
      %p208 = scmp.eq.s32.totalorder %s14, 3
      %p209 = por %p207, %p208
      %p210 = scmp.ne.s32.totalorder %s202, %s205
      %p211 = scmp.eq.s32.totalorder %s14, 0
      %p212 = por %p210, %p211
      %p213 = scmp.ne.s32.totalorder %s202, %s205
      %p214 = scmp.eq.s32.totalorder %s19, 3
      %p215 = por %p213, %p214
      %p216 = scmp.ne.s32.totalorder %s205, %s206
      %p217 = scmp.eq.s32.totalorder %s19, 0
      %p218 = por %p216, %p217
      %p219 = scmp.ne.s32.totalorder %s205, %s206
      %p220 = scmp.eq.s32.totalorder %s20, 3
      %p221 = por %p219, %p220
      %p223 = scmp.ne.s32.totalorder %s206, %s222
      %p224 = scmp.eq.s32.totalorder %s20, 0
      %p225 = por %p223, %p224
      %p226 = scmp.le.s32.totalorder 1, %s14
      %p227 = scmp.lt.s32.totalorder %s14, 5
      %p228 = pnand %p226, %p227
      %p229 = pneg %p228
      // Predicated region
      $region9: #{ntm_forward.1} parent=5 // pred_check
        _
      $region10: #{ntm_forward.1} parent=5 // pred_check_branch
        %231 = sbr.rel (%p228) target = $region12
      $region11: #{ntm_forward.1} parent=5 // pred_region
        %s232 = ssub.s32 %s14, 1
        // Predicated region
        $region13: #{ntm_forward.1} parent=11 // pred_check
          %p233 = pneg %p87
        $region14: #{ntm_forward.1} parent=11 // pred_check_branch
          %235 = sbr.rel (%p233) target = $region16
        $region15: #{ntm_forward.1} parent=11 // pred_region
          _
        $region16: #{ntm_forward.1} parent=11 // pred_fallthru
          _
        // Predicated region
        $region17: #{ntm_forward.1} parent=11 // pred_check
          %p236 = pneg %p108
        $region18: #{ntm_forward.1} parent=11 // pred_check_branch
          %238 = sbr.rel (%p236) target = $region20
        $region19: #{ntm_forward.1} parent=11 // pred_region
          _
        $region20: #{ntm_forward.1} parent=11 // pred_fallthru
          _
        // Predicated region
        $region21: #{ntm_forward.1} parent=11 // pred_check
          %p239 = pneg %p129
        $region22: #{ntm_forward.1} parent=11 // pred_check_branch
          %241 = sbr.rel (%p239) target = $region24
        $region23: #{ntm_forward.1} parent=11 // pred_region
          _
        $region24: #{ntm_forward.1} parent=11 // pred_fallthru
          _
        // Predicated region
        $region25: #{ntm_forward.1} parent=11 // pred_check
          %p242 = pneg %p150
        $region26: #{ntm_forward.1} parent=11 // pred_check_branch
          %244 = sbr.rel (%p242) target = $region28
        $region27: #{ntm_forward.1} parent=11 // pred_region
          _
        $region28: #{ntm_forward.1} parent=11 // pred_fallthru
          _
        // Predicated region
        $region29: #{ntm_forward.1} parent=11 // pred_check
          %p245 = pneg %p171
        $region30: #{ntm_forward.1} parent=11 // pred_check_branch
          %247 = sbr.rel (%p245) target = $region32
        $region31: #{ntm_forward.1} parent=11 // pred_region
          _
        $region32: #{ntm_forward.1} parent=11 // pred_fallthru
          _
        // Predicated region
        $region33: #{ntm_forward.1} parent=11 // pred_check
          %p248 = pneg %p192
        $region34: #{ntm_forward.1} parent=11 // pred_check_branch
          %250 = sbr.rel (%p248) target = $region36
        $region35: #{ntm_forward.1} parent=11 // pred_region
          _
        $region36: #{ntm_forward.1} parent=11 // pred_fallthru
          _
      $region12: #{ntm_forward.1} parent=5 // pred_fallthru
        _
      %p251 = scmp.lt.s32.totalorder %s14, 4
      // Predicated region
      $region37: #{ntm_forward.1} parent=5 // pred_check
        %p252 = pneg %p251
      $region38: #{ntm_forward.1} parent=5 // pred_check_branch
        %254 = sbr.rel (%p252) target = $region40
      $region39: #{ntm_forward.1} parent=5 // pred_region
        // Predicated region
        $region41: #{ntm_forward.1} parent=39 // pred_check
          %p255 = pneg %p34
        $region42: #{ntm_forward.1} parent=39 // pred_check_branch
          %257 = sbr.rel (%p255) target = $region44
        $region43: #{ntm_forward.1} parent=39 // pred_region
          %s258 = smul.u32 8, %s14
          %p259 = scmp.lt.s32.totalorder %s258, 31
          %s260 = scalar_select %p259, %s258, 31
          %s261 = smul.addr %s260, 2
          %s262 = smul.addr %s261, 8
          %s263 = scalar_lea.vmem %s0, %s262
          %s264 = smul.u32 8, %s14
        $region44: #{ntm_forward.1} parent=39 // pred_fallthru
          _
        // Predicated region
        $region45: #{ntm_forward.1} parent=39 // pred_check
          %p265 = pneg %p60
        $region46: #{ntm_forward.1} parent=39 // pred_check_branch
          %267 = sbr.rel (%p265) target = $region48
        $region47: #{ntm_forward.1} parent=39 // pred_region
          %s268 = sand.u32 %s50, 1
          %s269 = sand.u32 %s50, 1
          %s270 = smul.addr %s269, 128
          %s271 = scalar_lea.vmem [#allocation2], %s270
          %s272 = smul.u32 8, %s14
          %s273 = smul.addr %s272, 8
          %s274 = scalar_lea.vmem %s1, %s273
          // Predicated region
          $region49: #{ntm_forward.1} parent=47 // pred_check
            _
          $region50: #{ntm_forward.1} parent=47 // pred_check_branch
            %276 = sbr.rel (0) target = $region52
          $region51: #{ntm_forward.1} parent=47 // pred_region
            // Predicated region
            $region53: #{ntm_forward.1} parent=51 // pred_check
              _
            $region54: #{ntm_forward.1} parent=51 // pred_check_branch
              %278 = sbr.rel (0) target = $region56
            $region55: #{ntm_forward.1} parent=51 // pred_region
              // Predicated region
              $region68: #{ntm_forward.1} parent=55 // pred_check
                _
              $region69: #{ntm_forward.1} parent=55 // pred_check_branch
                %323 = sbr.rel (0) target = $region71
              $region70: #{ntm_forward.1} parent=55 // pred_region
                loop: start=0, step=1, limit=1
                $region72: #{ntm_forward.1} parent=70 // loop_pre_header
                  _
                $region73: #{ntm_forward.1} parent=70 // loop_header
                  %s325 = sphi 0, %s329
                  %p326 = scmp.ge.s32.totalorder %s325, 1
                  %s330 = sphi %s274, %s274
                  %s331 = sphi %s271, %s271
                $region74: #{ntm_forward.1} parent=70 // loop_header_branch
                  %328 = sbr.rel (%p326) target = $region78
                $region75: #{ntm_forward.1} parent=70 // loop_body
                  %v332 = vld [vmem:[%s330] sm:$0xff]
                  %333 = vst [vmem:[%s331] sm:$0xff] %v332
                  %v334 = vld [vmem:[%s330 + $0x8] sm:$0xff]
                  %335 = vst [vmem:[%s331 + $0x8] sm:$0xff] %v334
                  %v336 = vld [vmem:[%s330 + $0x10] sm:$0xff]
                  %337 = vst [vmem:[%s331 + $0x10] sm:$0xff] %v336
                  %v338 = vld [vmem:[%s330 + $0x18] sm:$0xff]
                  %339 = vst [vmem:[%s331 + $0x18] sm:$0xff] %v338
                  %v340 = vld [vmem:[%s330 + $0x20] sm:$0xff]
                  %341 = vst [vmem:[%s331 + $0x20] sm:$0xff] %v340
                  %v342 = vld [vmem:[%s330 + $0x28] sm:$0xff]
                  %343 = vst [vmem:[%s331 + $0x28] sm:$0xff] %v342
                  %v344 = vld [vmem:[%s330 + $0x30] sm:$0xff]
                  %345 = vst [vmem:[%s331 + $0x30] sm:$0xff] %v344
                  %v346 = vld [vmem:[%s330 + $0x38] sm:$0xff]
                  %347 = vst [vmem:[%s331 + $0x38] sm:$0xff] %v346
                  %v348 = vld [vmem:[%s330 + $0x100] sm:$0xff]
                  %349 = vst [vmem:[%s331 + $0x40] sm:$0xff] %v348
                  %v350 = vld [vmem:[%s330 + $0x108] sm:$0xff]
                  %351 = vst [vmem:[%s331 + $0x48] sm:$0xff] %v350
                  %v352 = vld [vmem:[%s330 + $0x110] sm:$0xff]
                  %353 = vst [vmem:[%s331 + $0x50] sm:$0xff] %v352
                  %v354 = vld [vmem:[%s330 + $0x118] sm:$0xff]
                  %355 = vst [vmem:[%s331 + $0x58] sm:$0xff] %v354
                  %v356 = vld [vmem:[%s330 + $0x120] sm:$0xff]
                  %357 = vst [vmem:[%s331 + $0x60] sm:$0xff] %v356
                  %v358 = vld [vmem:[%s330 + $0x128] sm:$0xff]
                  %359 = vst [vmem:[%s331 + $0x68] sm:$0xff] %v358
                  %v360 = vld [vmem:[%s330 + $0x130] sm:$0xff]
                  %361 = vst [vmem:[%s331 + $0x70] sm:$0xff] %v360
                  %v362 = vld [vmem:[%s330 + $0x138] sm:$0xff]
                  %363 = vst [vmem:[%s331 + $0x78] sm:$0xff] %v362
                $region76: #{ntm_forward.1} parent=70 // loop_footer
                  %s329 = sadd.s32 1, %s325
                $region77: #{ntm_forward.1} parent=70 // loop_footer_branch
                  %324 = sbr.rel target = $region73
                $region78: #{ntm_forward.1} parent=70 // loop_exit
                  _
              $region71: #{ntm_forward.1} parent=55 // pred_fallthru
                _
              // Predicated region
              $region79: #{ntm_forward.1} parent=55 // pred_check
                _
              $region80: #{ntm_forward.1} parent=55 // pred_check_branch
                %365 = sbr.rel target = $region82
              $region81: #{ntm_forward.1} parent=55 // pred_region
                _
              $region82: #{ntm_forward.1} parent=55 // pred_fallthru
                _
            $region56: #{ntm_forward.1} parent=51 // pred_fallthru
              _
            // Predicated region
            $region57: #{ntm_forward.1} parent=51 // pred_check
              _
            $region58: #{ntm_forward.1} parent=51 // pred_check_branch
              %280 = sbr.rel target = $region60
            $region59: #{ntm_forward.1} parent=51 // pred_region
              loop: start=0, step=1, limit=1
              $region61: #{ntm_forward.1} parent=59 // loop_pre_header
                _
              $region62: #{ntm_forward.1} parent=59 // loop_header
                %s283 = sphi 0, %s287
                %p284 = scmp.ge.s32.totalorder %s283, 1
                %s288 = sphi %s274, %s274
                %s289 = sphi %s271, %s271
              $region63: #{ntm_forward.1} parent=59 // loop_header_branch
                %286 = sbr.rel (%p284) target = $region67
              $region64: #{ntm_forward.1} parent=59 // loop_body
                %v290 = vld [vmem:[%s288] sm:$0xff]
                %291 = vst [vmem:[%s289] sm:$0xff] %v290
                %v292 = vld [vmem:[%s288 + $0x8] sm:$0xff]
                %293 = vst [vmem:[%s289 + $0x8] sm:$0xff] %v292
                %v294 = vld [vmem:[%s288 + $0x10] sm:$0xff]
                %295 = vst [vmem:[%s289 + $0x10] sm:$0xff] %v294
                %v296 = vld [vmem:[%s288 + $0x18] sm:$0xff]
                %297 = vst [vmem:[%s289 + $0x18] sm:$0xff] %v296
                %v298 = vld [vmem:[%s288 + $0x20] sm:$0xff]
                %299 = vst [vmem:[%s289 + $0x20] sm:$0xff] %v298
                %v300 = vld [vmem:[%s288 + $0x28] sm:$0xff]
                %301 = vst [vmem:[%s289 + $0x28] sm:$0xff] %v300
                %v302 = vld [vmem:[%s288 + $0x30] sm:$0xff]
                %303 = vst [vmem:[%s289 + $0x30] sm:$0xff] %v302
                %v304 = vld [vmem:[%s288 + $0x38] sm:$0xff]
                %305 = vst [vmem:[%s289 + $0x38] sm:$0xff] %v304
                %v306 = vld [vmem:[%s288 + $0x100] sm:$0xff]
                %307 = vst [vmem:[%s289 + $0x40] sm:$0xff] %v306
                %v308 = vld [vmem:[%s288 + $0x108] sm:$0xff]
                %309 = vst [vmem:[%s289 + $0x48] sm:$0xff] %v308
                %v310 = vld [vmem:[%s288 + $0x110] sm:$0xff]
                %311 = vst [vmem:[%s289 + $0x50] sm:$0xff] %v310
                %v312 = vld [vmem:[%s288 + $0x118] sm:$0xff]
                %313 = vst [vmem:[%s289 + $0x58] sm:$0xff] %v312
                %v314 = vld [vmem:[%s288 + $0x120] sm:$0xff]
                %315 = vst [vmem:[%s289 + $0x60] sm:$0xff] %v314
                %v316 = vld [vmem:[%s288 + $0x128] sm:$0xff]
                %317 = vst [vmem:[%s289 + $0x68] sm:$0xff] %v316
                %v318 = vld [vmem:[%s288 + $0x130] sm:$0xff]
                %319 = vst [vmem:[%s289 + $0x70] sm:$0xff] %v318
                %v320 = vld [vmem:[%s288 + $0x138] sm:$0xff]
                %321 = vst [vmem:[%s289 + $0x78] sm:$0xff] %v320
              $region65: #{ntm_forward.1} parent=59 // loop_footer
                %s287 = sadd.s32 1, %s283
              $region66: #{ntm_forward.1} parent=59 // loop_footer_branch
                %282 = sbr.rel target = $region62
              $region67: #{ntm_forward.1} parent=59 // loop_exit
                _
            $region60: #{ntm_forward.1} parent=51 // pred_fallthru
              _
          $region52: #{ntm_forward.1} parent=47 // pred_fallthru
            _
          %366 = vnop
        $region48: #{ntm_forward.1} parent=39 // pred_fallthru
          _
      $region40: #{ntm_forward.1} parent=5 // pred_fallthru
        _
      %p367 = scmp.le.s32.totalorder 1, %s14
      %p368 = scmp.lt.s32.totalorder %s14, 5
      %p369 = pnand %p367, %p368
      %p370 = pneg %p369
      // Predicated region
      $region83: #{ntm_forward.1} parent=5 // pred_check
        _
      $region84: #{ntm_forward.1} parent=5 // pred_check_branch
        %372 = sbr.rel (%p369) target = $region86
      $region85: #{ntm_forward.1} parent=5 // pred_region
        %s373 = ssub.s32 %s14, 1
        %s374 = sand.u32 %s53, 1
        %s375 = sand.u32 %s53, 1
        %s376 = smul.addr %s375, 128
        %s377 = scalar_lea.vmem [#allocation2], %s376
        // Predicated region
        $region87: #{ntm_forward.1} parent=85 // pred_check
          %p378 = pneg %p66
        $region88: #{ntm_forward.1} parent=85 // pred_check_branch
          %380 = sbr.rel (%p378) target = $region90
        $region89: #{ntm_forward.1} parent=85 // pred_region
          _
        $region90: #{ntm_forward.1} parent=85 // pred_fallthru
          _
        %s381 = smul.u32 8, %s19
        %p382 = scmp.lt.s32.totalorder %s381, 31
        %s383 = scalar_select %p382, %s381, 31
        %s384 = smul.addr %s383, 2
        %s385 = smul.addr %s384, 8
        %s386 = scalar_lea.vmem %s0, %s385
        %p387 = pneg %p40
        %p388 = pneg %p37
        %s389 = sand.u32 %s53, 1
        %s390 = sand.u32 %s53, 1
        %s391 = smul.addr %s390, 128
        %s392 = scalar_lea.vmem [#allocation2], %s391
        %p393 = pneg %p66
        %p394 = pneg %p63
        %p395 = pneg %p87
        %p396 = pneg %p84
        %p397 = pneg %p108
        %p398 = pneg %p105
        %p399 = pneg %p129
        %p400 = pneg %p126
        %p401 = pneg %p150
        %p402 = pneg %p147
        %p403 = pneg %p171
        %p404 = pneg %p168
        %p405 = pneg %p192
        %p406 = pneg %p189
        %p407 = pneg %p218
        %p408 = pneg %p215
        %s409 = smul.u32 8, %s19
        %p410 = scmp.lt.s32.totalorder %s409, 31
        %s411 = scalar_select %p410, %s409, 31
        %s412 = smul.addr %s411, 8
        %s413 = scalar_lea.vmem %s8, %s412
        %s414 = smul.u32 8, %s19
        %p415 = scmp.lt.s32.totalorder %s414, 31
        %s416 = scalar_select %p415, %s414, 31
        %s417 = smul.addr %s416, 2
        %s418 = smul.addr %s417, 8
        %s419 = scalar_lea.vmem %s0, %s418
        %s420 = smul.u32 8, %s19
        %s421 = smul.u32 8, %s19
        %s422 = smul.u32 8, %s19
        %p423 = scmp.lt.s32.totalorder %s422, 31
        %s424 = scalar_select %p423, %s422, 31
        %s425 = smul.addr %s424, 8
        %s426 = scalar_lea.vmem %s8, %s425
        %s427 = smul.u32 8, %s19
        %v429 = vld [vmem:[%s419] sm:$0xff]
        %v430 = vld [vmem:[%s419 + $0x8] sm:$0xff]
        %v431 = vld [vmem:[%s419 + $0x10] sm:$0xff]
        %v432 = vld [vmem:[%s419 + $0x18] sm:$0xff]
        %v433 = vld [vmem:[%s419 + $0x20] sm:$0xff]
        %v434 = vld [vmem:[%s419 + $0x28] sm:$0xff]
        %v435 = vld [vmem:[%s419 + $0x30] sm:$0xff]
        %v436 = vld [vmem:[%s419 + $0x38] sm:$0xff]
        %v437 = vld [vmem:[%s419 + $0x40] sm:$0xff]
        %v438 = vld [vmem:[%s419 + $0x48] sm:$0xff]
        %v439 = vld [vmem:[%s419 + $0x50] sm:$0xff]
        %v440 = vld [vmem:[%s419 + $0x58] sm:$0xff]
        %v441 = vld [vmem:[%s419 + $0x60] sm:$0xff]
        %v442 = vld [vmem:[%s419 + $0x68] sm:$0xff]
        %v443 = vld [vmem:[%s419 + $0x70] sm:$0xff]
        %v444 = vld [vmem:[%s419 + $0x78] sm:$0xff]
        %v445 = vpack.c.bf16 %v431, %v429
        %v446 = vpack.c.bf16 %v432, %v430
        %v447 = vpack.c.bf16 %v435, %v433
        %v448 = vpack.c.bf16 %v436, %v434
        %v449 = vpack.c.bf16 %v439, %v437
        %v450 = vpack.c.bf16 %v440, %v438
        %v451 = vpack.c.bf16 %v443, %v441
        %v452 = vpack.c.bf16 %v444, %v442
        %v453 = vld [vmem:[%s2] sm:$0xf]
        %v454 = vld [vmem:[%s2 + $0x4] sm:$0xf]
        %v455 = vld [vmem:[%s2 + $0x8] sm:$0xf]
        %v456 = vld [vmem:[%s2 + $0xc] sm:$0xf]
        %v457 = vld [vmem:[%s2 + $0x10] sm:$0xf]
        %v458 = vld [vmem:[%s2 + $0x14] sm:$0xf]
        %v459 = vld [vmem:[%s2 + $0x18] sm:$0xf]
        %v460 = vld [vmem:[%s2 + $0x1c] sm:$0xf]
        %v461 = vld [vmem:[%s2 + $0x20] sm:$0xf]
        %v462 = vld [vmem:[%s2 + $0x24] sm:$0xf]
        %v463 = vld [vmem:[%s2 + $0x28] sm:$0xf]
        %v464 = vld [vmem:[%s2 + $0x2c] sm:$0xf]
        %v465 = vld [vmem:[%s2 + $0x30] sm:$0xf]
        %v466 = vld [vmem:[%s2 + $0x34] sm:$0xf]
        %v467 = vld [vmem:[%s2 + $0x38] sm:$0xf]
        %v468 = vld [vmem:[%s2 + $0x3c] sm:$0xf]
        %v469 = vld [vmem:[%s2 + $0x40] sm:$0xf]
        %v470 = vld [vmem:[%s2 + $0x44] sm:$0xf]
        %v471 = vld [vmem:[%s2 + $0x48] sm:$0xf]
        %v472 = vld [vmem:[%s2 + $0x4c] sm:$0xf]
        %v473 = vld [vmem:[%s2 + $0x50] sm:$0xf]
        %v474 = vld [vmem:[%s2 + $0x54] sm:$0xf]
        %v475 = vld [vmem:[%s2 + $0x58] sm:$0xf]
        %v476 = vld [vmem:[%s2 + $0x5c] sm:$0xf]
        %v477 = vld [vmem:[%s2 + $0x60] sm:$0xf]
        %v478 = vld [vmem:[%s2 + $0x64] sm:$0xf]
        %v479 = vld [vmem:[%s2 + $0x68] sm:$0xf]
        %v480 = vld [vmem:[%s2 + $0x6c] sm:$0xf]
        %v481 = vld [vmem:[%s2 + $0x70] sm:$0xf]
        %v482 = vld [vmem:[%s2 + $0x74] sm:$0xf]
        %v483 = vld [vmem:[%s2 + $0x78] sm:$0xf]
        %v484 = vld [vmem:[%s2 + $0x7c] sm:$0xf]
        %v485 = vld [vmem:[%s3] sm:$0x1]
        %v487 = vlaneseq
        %v488 = vshrl.u32 %v487, 7
        %v489 = vsub.s32 0, %v488
        %v490 = vrot.slane %v485, %v489
        %v524 = vunpack.c.l.b16 %v453
        %v525 = vunpack.c.l.b16 %v454
        %v526 = vunpack.c.l.b16 %v455
        %v527 = vunpack.c.l.b16 %v456
        %v528 = vunpack.c.l.b16 %v457
        %v529 = vunpack.c.l.b16 %v458
        %v530 = vunpack.c.l.b16 %v459
        %v531 = vunpack.c.l.b16 %v460
        %v532 = vunpack.c.l.b16 %v461
        %v533 = vunpack.c.l.b16 %v462
        %v534 = vunpack.c.l.b16 %v463
        %v535 = vunpack.c.l.b16 %v464
        %v536 = vunpack.c.l.b16 %v465
        %v537 = vunpack.c.l.b16 %v466
        %v538 = vunpack.c.l.b16 %v467
        %v539 = vunpack.c.l.b16 %v468
        %v540 = vunpack.c.l.b16 %v469
        %v541 = vunpack.c.l.b16 %v470
        %v542 = vunpack.c.l.b16 %v471
        %v543 = vunpack.c.l.b16 %v472
        %v544 = vunpack.c.l.b16 %v473
        %v545 = vunpack.c.l.b16 %v474
        %v546 = vunpack.c.l.b16 %v475
        %v547 = vunpack.c.l.b16 %v476
        %v548 = vunpack.c.l.b16 %v477
        %v549 = vunpack.c.l.b16 %v478
        %v550 = vunpack.c.l.b16 %v479
        %v551 = vunpack.c.l.b16 %v480
        %v552 = vunpack.c.l.b16 %v481
        %v553 = vunpack.c.l.b16 %v482
        %v554 = vunpack.c.l.b16 %v483
        %v555 = vunpack.c.l.b16 %v484
        %v556 = vpack.c.b16 %v525, %v524
        %v557 = vpack.c.b16 %v527, %v526
        %v558 = vpack.c.b16 %v529, %v528
        %v559 = vpack.c.b16 %v531, %v530
        %v560 = vpack.c.b16 %v533, %v532
        %v561 = vpack.c.b16 %v535, %v534
        %v562 = vpack.c.b16 %v537, %v536
        %v563 = vpack.c.b16 %v539, %v538
        %v564 = vpack.c.b16 %v541, %v540
        %v565 = vpack.c.b16 %v543, %v542
        %v566 = vpack.c.b16 %v545, %v544
        %v567 = vpack.c.b16 %v547, %v546
        %v568 = vpack.c.b16 %v549, %v548
        %v569 = vpack.c.b16 %v551, %v550
        %v570 = vpack.c.b16 %v553, %v552
        %v571 = vpack.c.b16 %v555, %v554
        %588 = vmatprep.subr.bf16.mxu0 0
        %589 = vmatpush1.bf16.msra.mxu0 %v556
        %590 = vmatprep.subr.bf16.mxu0 0
        %591 = vmatpush1.bf16.msra.mxu0 %v557
        %592 = vmatprep.subr.bf16.mxu0 0
        %593 = vmatpush1.bf16.msra.mxu0 %v558
        %594 = vmatprep.subr.bf16.mxu0 0
        %595 = vmatpush1.bf16.msra.mxu0 %v559
        %596 = vmatprep.subr.bf16.mxu0 0
        %597 = vmatpush1.bf16.msra.mxu0 %v560
        %598 = vmatprep.subr.bf16.mxu0 0
        %599 = vmatpush1.bf16.msra.mxu0 %v561
        %600 = vmatprep.subr.bf16.mxu0 0
        %601 = vmatpush1.bf16.msra.mxu0 %v562
        %602 = vmatprep.subr.bf16.mxu0 0
        %603 = vmatpush1.bf16.msra.mxu0 %v563
        %604 = vmatprep.subr.bf16.mxu0 0
        %605 = vmatpush1.bf16.msra.mxu0 %v564
        %606 = vmatprep.subr.bf16.mxu0 0
        %607 = vmatpush1.bf16.msra.mxu0 %v565
        %608 = vmatprep.subr.bf16.mxu0 0
        %609 = vmatpush1.bf16.msra.mxu0 %v566
        %610 = vmatprep.subr.bf16.mxu0 0
        %611 = vmatpush1.bf16.msra.mxu0 %v567
        %612 = vmatprep.subr.bf16.mxu0 0
        %613 = vmatpush1.bf16.msra.mxu0 %v568
        %614 = vmatprep.subr.bf16.mxu0 0
        %615 = vmatpush1.bf16.msra.mxu0 %v569
        %616 = vmatprep.subr.bf16.mxu0 0
        %617 = vmatpush1.bf16.msra.mxu0 %v570
        %618 = vmatprep.subr.bf16.mxu0 0
        %619 = vmatpush1.bf16.msra.mxu0 %v571
        %620 = vmatprep.mubr.bf16.mxu0 %v446
        %621 = vmatmul.mubr.bf16.gmra.mrb[0].mxu0 %v445
        %v622 = vpop.f32.mrb[0].mxu0
        %v623 = vadd.f32 %v490, %v622
        %v624 = vpop.f32.mrb[0].mxu0
        %v625 = vpop.f32.mrb[0].mxu0
        %v626 = vadd.f32 %v490, %v625
        %v627 = vpop.f32.mrb[0].mxu0
        %628 = vmatprep.mubr.bf16.mxu0 %v448
        %629 = vmatmul.mubr.bf16.gmra.mrb[0].mxu0 %v447
        %v630 = vpop.f32.mrb[0].mxu0
        %v631 = vadd.f32 %v490, %v630
        %v632 = vpop.f32.mrb[0].mxu0
        %v633 = vpop.f32.mrb[0].mxu0
        %v634 = vadd.f32 %v490, %v633
        %v635 = vpop.f32.mrb[0].mxu0
        %636 = vmatprep.mubr.bf16.mxu0 %v450
        %637 = vmatmul.mubr.bf16.gmra.mrb[0].mxu0 %v449
        %v638 = vpop.f32.mrb[0].mxu0
        %v639 = vadd.f32 %v490, %v638
        %v640 = vpop.f32.mrb[0].mxu0
        %v641 = vpop.f32.mrb[0].mxu0
        %v642 = vadd.f32 %v490, %v641
        %v643 = vpop.f32.mrb[0].mxu0
        %644 = vmatprep.mubr.bf16.mxu0 %v452
        %645 = vmatmul.mubr.bf16.gmra.mrb[0].mxu0 %v451
        %v646 = vpop.f32.mrb[0].mxu0
        %v647 = vadd.f32 %v490, %v646
        %v648 = vpop.f32.mrb[0].mxu0
        %v649 = vpop.f32.mrb[0].mxu0
        %v650 = vadd.f32 %v490, %v649
        %v651 = vpop.f32.mrb[0].mxu0
        %652 = vdwg.mxu0
        %v653 = vmax.f32 %v623, 0.0
        %v654 = vmax.f32 %v626, 0.0
        %v655 = vmax.f32 %v631, 0.0
        %v656 = vmax.f32 %v634, 0.0
        %v657 = vmax.f32 %v639, 0.0
        %v658 = vmax.f32 %v642, 0.0
        %v659 = vmax.f32 %v647, 0.0
        %v660 = vmax.f32 %v650, 0.0
        %v661 = vand.u32 2147483647, %v623
        %v662 = vand.u32 2147483647, %v626
        %v663 = vand.u32 2147483647, %v631
        %v664 = vand.u32 2147483647, %v634
        %v665 = vand.u32 2147483647, %v639
        %v666 = vand.u32 2147483647, %v642
        %v667 = vand.u32 2147483647, %v647
        %v668 = vand.u32 2147483647, %v650
        %v669 = vsub.f32 0.0, %v661
        %v670 = vsub.f32 0.0, %v662
        %v671 = vsub.f32 0.0, %v663
        %v672 = vsub.f32 0.0, %v664
        %v673 = vsub.f32 0.0, %v665
        %v674 = vsub.f32 0.0, %v666
        %v675 = vsub.f32 0.0, %v667
        %v676 = vsub.f32 0.0, %v668
        %v677 = vmul.f32 %v669, 1.442695
        %v678 = vpow.pop %v677
        %v679 = vmul.f32 %v670, 1.442695
        %v680 = vpow.pop %v679
        %v681 = vmul.f32 %v671, 1.442695
        %v682 = vpow.pop %v681
        %v683 = vmul.f32 %v672, 1.442695
        %v684 = vpow.pop %v683
        %v685 = vmul.f32 %v673, 1.442695
        %v686 = vpow.pop %v685
        %v687 = vmul.f32 %v674, 1.442695
        %v688 = vpow.pop %v687
        %v689 = vmul.f32 %v675, 1.442695
        %v690 = vpow.pop %v689
        %v691 = vmul.f32 %v676, 1.442695
        %v692 = vpow.pop %v691
        %v693 = vadd.f32 %v678, 1.0
        %v694 = vlog2.pop %v693
        %v695 = vmul.f32 %v694, 0.6931472
        %v696 = vmul.f32 -0.5, %v678
        %v697 = vadd.f32 %v696, 1.0
        %v698 = vmul.f32 %v697, %v678
        %v699 = vand.u32 2147483647, %v678
        %vm700 = vcmp.lt.f32.partialorder %v699, 0.0004427343
        %v701 = vsel %vm700, %v698, %v695
        %v702 = vadd.f32 %v680, 1.0
        %v703 = vlog2.pop %v702
        %v704 = vmul.f32 %v703, 0.6931472
        %v705 = vmul.f32 -0.5, %v680
        %v706 = vadd.f32 %v705, 1.0
        %v707 = vmul.f32 %v706, %v680
        %v708 = vand.u32 2147483647, %v680
        %vm709 = vcmp.lt.f32.partialorder %v708, 0.0004427343
        %v710 = vsel %vm709, %v707, %v704
        %v711 = vadd.f32 %v682, 1.0
        %v712 = vlog2.pop %v711
        %v713 = vmul.f32 %v712, 0.6931472
        %v714 = vmul.f32 -0.5, %v682
        %v715 = vadd.f32 %v714, 1.0
        %v716 = vmul.f32 %v715, %v682
        %v717 = vand.u32 2147483647, %v682
        %vm718 = vcmp.lt.f32.partialorder %v717, 0.0004427343
        %v719 = vsel %vm718, %v716, %v713
        %v720 = vadd.f32 %v684, 1.0
        %v721 = vlog2.pop %v720
        %v722 = vmul.f32 %v721, 0.6931472
        %v723 = vmul.f32 -0.5, %v684
        %v724 = vadd.f32 %v723, 1.0
        %v725 = vmul.f32 %v724, %v684
        %v726 = vand.u32 2147483647, %v684
        %vm727 = vcmp.lt.f32.partialorder %v726, 0.0004427343
        %v728 = vsel %vm727, %v725, %v722
        %v729 = vadd.f32 %v686, 1.0
        %v730 = vlog2.pop %v729
        %v731 = vmul.f32 %v730, 0.6931472
        %v732 = vmul.f32 -0.5, %v686
        %v733 = vadd.f32 %v732, 1.0
        %v734 = vmul.f32 %v733, %v686
        %v735 = vand.u32 2147483647, %v686
        %vm736 = vcmp.lt.f32.partialorder %v735, 0.0004427343
        %v737 = vsel %vm736, %v734, %v731
        %v738 = vadd.f32 %v688, 1.0
        %v739 = vlog2.pop %v738
        %v740 = vmul.f32 %v739, 0.6931472
        %v741 = vmul.f32 -0.5, %v688
        %v742 = vadd.f32 %v741, 1.0
        %v743 = vmul.f32 %v742, %v688
        %v744 = vand.u32 2147483647, %v688
        %vm745 = vcmp.lt.f32.partialorder %v744, 0.0004427343
        %v746 = vsel %vm745, %v743, %v740
        %v747 = vadd.f32 %v690, 1.0
        %v748 = vlog2.pop %v747
        %v749 = vmul.f32 %v748, 0.6931472
        %v750 = vmul.f32 -0.5, %v690
        %v751 = vadd.f32 %v750, 1.0
        %v752 = vmul.f32 %v751, %v690
        %v753 = vand.u32 2147483647, %v690
        %vm754 = vcmp.lt.f32.partialorder %v753, 0.0004427343
        %v755 = vsel %vm754, %v752, %v749
        %v756 = vadd.f32 %v692, 1.0
        %v757 = vlog2.pop %v756
        %v758 = vmul.f32 %v757, 0.6931472
        %v759 = vmul.f32 -0.5, %v692
        %v760 = vadd.f32 %v759, 1.0
        %v761 = vmul.f32 %v760, %v692
        %v762 = vand.u32 2147483647, %v692
        %vm763 = vcmp.lt.f32.partialorder %v762, 0.0004427343
        %v764 = vsel %vm763, %v761, %v758
        %v765 = vadd.f32 %v653, %v701
        %v766 = vadd.f32 %v654, %v710
        %v767 = vadd.f32 %v655, %v719
        %v768 = vadd.f32 %v656, %v728
        %v769 = vadd.f32 %v657, %v737
        %v770 = vadd.f32 %v658, %v746
        %v771 = vadd.f32 %v659, %v755
        %v772 = vadd.f32 %v660, %v764
        %v773 = vpack.c.bf16 %v766, %v765
        %v774 = vpack.c.bf16 %v768, %v767
        %v775 = vpack.c.bf16 %v770, %v769
        %v776 = vpack.c.bf16 %v772, %v771
        %v777 = vld [vmem:[%s4] sm:$0xff]
        %v778 = vld [vmem:[%s4 + $0x8] sm:$0xff]
        %v779 = vld [vmem:[%s4 + $0x10] sm:$0xff]
        %v780 = vld [vmem:[%s4 + $0x18] sm:$0xff]
        %v781 = vld [vmem:[%s4 + $0x20] sm:$0xff]
        %v782 = vld [vmem:[%s4 + $0x28] sm:$0xff]
        %v783 = vld [vmem:[%s4 + $0x30] sm:$0xff]
        %v784 = vld [vmem:[%s4 + $0x38] sm:$0xff]
        %v785 = vld [vmem:[%s4 + $0x40] sm:$0xff]
        %v786 = vld [vmem:[%s4 + $0x48] sm:$0xff]
        %v787 = vld [vmem:[%s4 + $0x50] sm:$0xff]
        %v788 = vld [vmem:[%s4 + $0x58] sm:$0xff]
        %v789 = vld [vmem:[%s4 + $0x60] sm:$0xff]
        %v790 = vld [vmem:[%s4 + $0x68] sm:$0xff]
        %v791 = vld [vmem:[%s4 + $0x70] sm:$0xff]
        %v792 = vld [vmem:[%s4 + $0x78] sm:$0xff]
        %v793 = vld [vmem:[%s5] sm:$0x3]
        %v795 = vlaneseq
        %v796 = vshrl.u32 %v795, 7
        %v797 = vsub.s32 0, %v796
        %v798 = vrot.slane %v793, %v797
        %v799 = vlaneseq
        %v800 = vshrl.u32 %v799, 7
        %v801 = vsub.s32 1, %v800
        %v802 = vrot.slane %v793, %v801
        %v821 = vunpack.c.l.b16 %v777
        %v822 = vunpack.c.h.b16 %v777
        %v823 = vunpack.c.l.b16 %v778
        %v824 = vunpack.c.h.b16 %v778
        %v825 = vunpack.c.l.b16 %v779
        %v826 = vunpack.c.h.b16 %v779
        %v827 = vunpack.c.l.b16 %v780
        %v828 = vunpack.c.h.b16 %v780
        %v829 = vunpack.c.l.b16 %v781
        %v830 = vunpack.c.h.b16 %v781
        %v831 = vunpack.c.l.b16 %v782
        %v832 = vunpack.c.h.b16 %v782
        %v833 = vunpack.c.l.b16 %v783
        %v834 = vunpack.c.h.b16 %v783
        %v835 = vunpack.c.l.b16 %v784
        %v836 = vunpack.c.h.b16 %v784
        %v837 = vunpack.c.l.b16 %v785
        %v838 = vunpack.c.h.b16 %v785
        %v839 = vunpack.c.l.b16 %v786
        %v840 = vunpack.c.h.b16 %v786
        %v841 = vunpack.c.l.b16 %v787
        %v842 = vunpack.c.h.b16 %v787
        %v843 = vunpack.c.l.b16 %v788
        %v844 = vunpack.c.h.b16 %v788
        %v845 = vunpack.c.l.b16 %v789
        %v846 = vunpack.c.h.b16 %v789
        %v847 = vunpack.c.l.b16 %v790
        %v848 = vunpack.c.h.b16 %v790
        %v849 = vunpack.c.l.b16 %v791
        %v850 = vunpack.c.h.b16 %v791
        %v851 = vunpack.c.l.b16 %v792
        %v852 = vunpack.c.h.b16 %v792
        %v853 = vpack.c.b16 %v823, %v821
        %v854 = vpack.c.b16 %v824, %v822
        %v855 = vpack.c.b16 %v827, %v825
        %v856 = vpack.c.b16 %v828, %v826
        %v857 = vpack.c.b16 %v831, %v829
        %v858 = vpack.c.b16 %v832, %v830
        %v859 = vpack.c.b16 %v835, %v833
        %v860 = vpack.c.b16 %v836, %v834
        %v861 = vpack.c.b16 %v839, %v837
        %v862 = vpack.c.b16 %v840, %v838
        %v863 = vpack.c.b16 %v843, %v841
        %v864 = vpack.c.b16 %v844, %v842
        %v865 = vpack.c.b16 %v847, %v845
        %v866 = vpack.c.b16 %v848, %v846
        %v867 = vpack.c.b16 %v851, %v849
        %v868 = vpack.c.b16 %v852, %v850
        %885 = vmatprep.subr.bf16.mxu0 %v854
        %886 = vmatpush1.bf16.msra.mxu0 %v853
        %887 = vmatprep.subr.bf16.mxu0 %v856
        %888 = vmatpush1.bf16.msra.mxu0 %v855
        %889 = vmatprep.subr.bf16.mxu0 %v858
        %890 = vmatpush1.bf16.msra.mxu0 %v857
        %891 = vmatprep.subr.bf16.mxu0 %v860
        %892 = vmatpush1.bf16.msra.mxu0 %v859
        %893 = vmatprep.subr.bf16.mxu0 %v862
        %894 = vmatpush1.bf16.msra.mxu0 %v861
        %895 = vmatprep.subr.bf16.mxu0 %v864
        %896 = vmatpush1.bf16.msra.mxu0 %v863
        %897 = vmatprep.subr.bf16.mxu0 %v866
        %898 = vmatpush1.bf16.msra.mxu0 %v865
        %899 = vmatprep.subr.bf16.mxu0 %v868
        %900 = vmatpush1.bf16.msra.mxu0 %v867
        %901 = vmatprep.subr.bf16.mxu0 0
        %902 = vmatpush1.bf16.msra.mxu0 0
        %903 = vmatprep.subr.bf16.mxu0 0
        %904 = vmatpush1.bf16.msra.mxu0 0
        %905 = vmatprep.subr.bf16.mxu0 0
        %906 = vmatpush1.bf16.msra.mxu0 0
        %907 = vmatprep.subr.bf16.mxu0 0
        %908 = vmatpush1.bf16.msra.mxu0 0
        %909 = vmatprep.subr.bf16.mxu0 0
        %910 = vmatpush1.bf16.msra.mxu0 0
        %911 = vmatprep.subr.bf16.mxu0 0
        %912 = vmatpush1.bf16.msra.mxu0 0
        %913 = vmatprep.subr.bf16.mxu0 0
        %914 = vmatpush1.bf16.msra.mxu0 0
        %915 = vmatprep.subr.bf16.mxu0 0
        %916 = vmatpush1.bf16.msra.mxu0 0
        %917 = vmatprep.mubr.bf16.mxu0 0
        %918 = vmatmul.mubr.bf16.gmra.mrb[0].mxu0 %v773
        %v919 = vpop.f32.mrb[0].mxu0
        %v920 = vadd.f32 %v798, %v919
        %v921 = vpop.f32.mrb[0].mxu0
        %v922 = vadd.f32 %v802, %v921
        %v923 = vpop.f32.mrb[0].mxu0
        %v924 = vadd.f32 %v798, %v923
        %v925 = vpop.f32.mrb[0].mxu0
        %v926 = vadd.f32 %v802, %v925
        %927 = vmatprep.mubr.bf16.mxu0 0
        %928 = vmatmul.mubr.bf16.gmra.mrb[0].mxu0 %v774
        %v929 = vpop.f32.mrb[0].mxu0
        %v930 = vadd.f32 %v798, %v929
        %v931 = vpop.f32.mrb[0].mxu0
        %v932 = vadd.f32 %v802, %v931
        %v933 = vpop.f32.mrb[0].mxu0
        %v934 = vadd.f32 %v798, %v933
        %v935 = vpop.f32.mrb[0].mxu0
        %v936 = vadd.f32 %v802, %v935
        %937 = vmatprep.mubr.bf16.mxu0 0
        %938 = vmatmul.mubr.bf16.gmra.mrb[0].mxu0 %v775
        %v939 = vpop.f32.mrb[0].mxu0
        %v940 = vadd.f32 %v798, %v939
        %v941 = vpop.f32.mrb[0].mxu0
        %v942 = vadd.f32 %v802, %v941
        %v943 = vpop.f32.mrb[0].mxu0
        %v944 = vadd.f32 %v798, %v943
        %v945 = vpop.f32.mrb[0].mxu0
        %v946 = vadd.f32 %v802, %v945
        %947 = vmatprep.mubr.bf16.mxu0 0
        %948 = vmatmul.mubr.bf16.gmra.mrb[0].mxu0 %v776
        %v949 = vpop.f32.mrb[0].mxu0
        %v950 = vadd.f32 %v798, %v949
        %v951 = vpop.f32.mrb[0].mxu0
        %v952 = vadd.f32 %v802, %v951
        %v953 = vpop.f32.mrb[0].mxu0
        %v954 = vadd.f32 %v798, %v953
        %v955 = vpop.f32.mrb[0].mxu0
        %v956 = vadd.f32 %v802, %v955
        %957 = vdwg.mxu0
        %v958 = vmul.f32 %v920, %v920
        %v959 = vmul.f32 %v924, %v924
        %v960 = vmul.f32 %v930, %v930
        %v961 = vmul.f32 %v934, %v934
        %v962 = vmul.f32 %v940, %v940
        %v963 = vmul.f32 %v944, %v944
        %v964 = vmul.f32 %v950, %v950
        %v965 = vmul.f32 %v954, %v954
        %v966 = vsub.f32 1.0, %v958
        %v967 = vsub.f32 1.0, %v959
        %v968 = vsub.f32 1.0, %v960
        %v969 = vsub.f32 1.0, %v961
        %v970 = vsub.f32 1.0, %v962
        %v971 = vsub.f32 1.0, %v963
        %v972 = vsub.f32 1.0, %v964
        %v973 = vsub.f32 1.0, %v965
        %v974 = vmul.f32 %v922, 2.0
        %v975 = vmul.f32 %v926, 2.0
        %v976 = vmul.f32 %v932, 2.0
        %v977 = vmul.f32 %v936, 2.0
        %v978 = vmul.f32 %v942, 2.0
        %v979 = vmul.f32 %v946, 2.0
        %v980 = vmul.f32 %v952, 2.0
        %v981 = vmul.f32 %v956, 2.0
        %v982 = vadd.f32 %v966, %v974
        %v983 = vadd.f32 %v967, %v975
        %v984 = vadd.f32 %v968, %v976
        %v985 = vadd.f32 %v969, %v977
        %v986 = vadd.f32 %v970, %v978
        %v987 = vadd.f32 %v971, %v979
        %v988 = vadd.f32 %v972, %v980
        %v989 = vadd.f32 %v973, %v981
        %v990 = vmul.f32 %v974, 1.442695
        %v991 = vpow.pop %v990
        %v992 = vmul.f32 %v975, 1.442695
        %v993 = vpow.pop %v992
        %v994 = vmul.f32 %v976, 1.442695
        %v995 = vpow.pop %v994
        %v996 = vmul.f32 %v977, 1.442695
        %v997 = vpow.pop %v996
        %v998 = vmul.f32 %v978, 1.442695
        %v999 = vpow.pop %v998
        %v1000 = vmul.f32 %v979, 1.442695
        %v1001 = vpow.pop %v1000
        %v1002 = vmul.f32 %v980, 1.442695
        %v1003 = vpow.pop %v1002
        %v1004 = vmul.f32 %v981, 1.442695
        %v1005 = vpow.pop %v1004
        %v1006 = vsub.f32 %v982, %v991
        %v1007 = vsub.f32 %v983, %v993
        %v1008 = vsub.f32 %v984, %v995
        %v1009 = vsub.f32 %v985, %v997
        %v1010 = vsub.f32 %v986, %v999
        %v1011 = vsub.f32 %v987, %v1001
        %v1012 = vsub.f32 %v988, %v1003
        %v1013 = vsub.f32 %v989, %v1005
        %1014 = vadd.xlane.f32.xlu0 %v1006
        %v1015 = vpop.xlane.xlu0 %1014
        %1016 = vadd.xlane.f32.xlu0 %v1007
        %v1017 = vpop.xlane.xlu0 %1016
        %1018 = vadd.xlane.f32.xlu0 %v1008
        %v1019 = vpop.xlane.xlu0 %1018
        %1020 = vadd.xlane.f32.xlu0 %v1009
        %v1021 = vpop.xlane.xlu0 %1020
        %1022 = vadd.xlane.f32.xlu0 %v1010
        %v1023 = vpop.xlane.xlu0 %1022
        %1024 = vadd.xlane.f32.xlu0 %v1011
        %v1025 = vpop.xlane.xlu0 %1024
        %1026 = vadd.xlane.f32.xlu0 %v1012
        %v1027 = vpop.xlane.xlu0 %1026
        %1028 = vadd.xlane.f32.xlu0 %v1013
        %v1029 = vpop.xlane.xlu0 %1028
        %v1030 = vmul.f32 %v1015, -0.5
        %v1031 = vmul.f32 %v1017, -0.5
        %v1032 = vmul.f32 %v1019, -0.5
        %v1033 = vmul.f32 %v1021, -0.5
        %v1034 = vmul.f32 %v1023, -0.5
        %v1035 = vmul.f32 %v1025, -0.5
        %v1036 = vmul.f32 %v1027, -0.5
        %v1037 = vmul.f32 %v1029, -0.5
        %v1038 = vadd.f32 %v429, %v430
        %1039 = vadd.xlane.f32.xlu0 %v1038
        %v1040 = vpop.xlane.xlu0 %1039
        %v1041 = vadd.f32 %v431, %v432
        %1042 = vadd.xlane.f32.xlu0 %v1041
        %v1043 = vpop.xlane.xlu0 %1042
        %v1044 = vadd.f32 %v433, %v434
        %1045 = vadd.xlane.f32.xlu0 %v1044
        %v1046 = vpop.xlane.xlu0 %1045
        %v1047 = vadd.f32 %v435, %v436
        %1048 = vadd.xlane.f32.xlu0 %v1047
        %v1049 = vpop.xlane.xlu0 %1048
        %v1050 = vadd.f32 %v437, %v438
        %1051 = vadd.xlane.f32.xlu0 %v1050
        %v1052 = vpop.xlane.xlu0 %1051
        %v1053 = vadd.f32 %v439, %v440
        %1054 = vadd.xlane.f32.xlu0 %v1053
        %v1055 = vpop.xlane.xlu0 %1054
        %v1056 = vadd.f32 %v441, %v442
        %1057 = vadd.xlane.f32.xlu0 %v1056
        %v1058 = vpop.xlane.xlu0 %1057
        %v1059 = vadd.f32 %v443, %v444
        %1060 = vadd.xlane.f32.xlu0 %v1059
        %v1061 = vpop.xlane.xlu0 %1060
        %v1062 = vmul.f32 %v922, 1.442695
        %v1063 = vpow.pop %v1062
        %v1064 = vmul.f32 %v926, 1.442695
        %v1065 = vpow.pop %v1064
        %v1066 = vmul.f32 %v932, 1.442695
        %v1067 = vpow.pop %v1066
        %v1068 = vmul.f32 %v936, 1.442695
        %v1069 = vpow.pop %v1068
        %v1070 = vmul.f32 %v942, 1.442695
        %v1071 = vpow.pop %v1070
        %v1072 = vmul.f32 %v946, 1.442695
        %v1073 = vpow.pop %v1072
        %v1074 = vmul.f32 %v952, 1.442695
        %v1075 = vpow.pop %v1074
        %v1076 = vmul.f32 %v956, 1.442695
        %v1077 = vpow.pop %v1076
        %v1078 = vld [vmem:[%s377] sm:$0xff]
        %v1079 = vld [vmem:[%s377 + $0x8] sm:$0xff]
        %v1080 = vld [vmem:[%s377 + $0x10] sm:$0xff]
        %v1081 = vld [vmem:[%s377 + $0x18] sm:$0xff]
        %v1082 = vld [vmem:[%s377 + $0x20] sm:$0xff]
        %v1083 = vld [vmem:[%s377 + $0x28] sm:$0xff]
        %v1084 = vld [vmem:[%s377 + $0x30] sm:$0xff]
        %v1085 = vld [vmem:[%s377 + $0x38] sm:$0xff]
        %v1086 = vld [vmem:[%s377 + $0x40] sm:$0xff]
        %v1087 = vld [vmem:[%s377 + $0x48] sm:$0xff]
        %v1088 = vld [vmem:[%s377 + $0x50] sm:$0xff]
        %v1089 = vld [vmem:[%s377 + $0x58] sm:$0xff]
        %v1090 = vld [vmem:[%s377 + $0x60] sm:$0xff]
        %v1091 = vld [vmem:[%s377 + $0x68] sm:$0xff]
        %v1092 = vld [vmem:[%s377 + $0x70] sm:$0xff]
        %v1093 = vld [vmem:[%s377 + $0x78] sm:$0xff]
        %v1094 = vmul.f32 %v1078, %v1063
        %v1095 = vmul.f32 %v1079, %v1065
        %v1096 = vmul.f32 %v1080, %v1067
        %v1097 = vmul.f32 %v1081, %v1069
        %v1098 = vmul.f32 %v1082, %v1071
        %v1099 = vmul.f32 %v1083, %v1073
        %v1100 = vmul.f32 %v1084, %v1075
        %v1101 = vmul.f32 %v1085, %v1077
        %v1102 = vmul.f32 %v1086, %v1063
        %v1103 = vmul.f32 %v1087, %v1065
        %v1104 = vmul.f32 %v1088, %v1067
        %v1105 = vmul.f32 %v1089, %v1069
        %v1106 = vmul.f32 %v1090, %v1071
        %v1107 = vmul.f32 %v1091, %v1073
        %v1108 = vmul.f32 %v1092, %v1075
        %v1109 = vmul.f32 %v1093, %v1077
        %v1110 = vadd.f32 %v1094, %v920
        %v1111 = vadd.f32 %v1095, %v924
        %v1112 = vadd.f32 %v1096, %v930
        %v1113 = vadd.f32 %v1097, %v934
        %v1114 = vadd.f32 %v1098, %v940
        %v1115 = vadd.f32 %v1099, %v944
        %v1116 = vadd.f32 %v1100, %v950
        %v1117 = vadd.f32 %v1101, %v954
        %v1118 = vadd.f32 %v1102, %v920
        %v1119 = vadd.f32 %v1103, %v924
        %v1120 = vadd.f32 %v1104, %v930
        %v1121 = vadd.f32 %v1105, %v934
        %v1122 = vadd.f32 %v1106, %v940
        %v1123 = vadd.f32 %v1107, %v944
        %v1124 = vadd.f32 %v1108, %v950
        %v1125 = vadd.f32 %v1109, %v954
        %v1126 = vlaneseq
        %v1127 = vand.u32 %v1126, 127
        %vm1128 = vcmp.ge.s32.totalorder %v1127, 16
        %v1129 = vsel %vm1128, -inf, %v1110
        %v1130 = vsel %vm1128, -inf, %v1111
        %v1131 = vsel %vm1128, -inf, %v1112
        %v1132 = vsel %vm1128, -inf, %v1113
        %v1133 = vsel %vm1128, -inf, %v1114
        %v1134 = vsel %vm1128, -inf, %v1115
        %v1135 = vsel %vm1128, -inf, %v1116
        %v1136 = vsel %vm1128, -inf, %v1117
        %v1137 = vsel %vm1128, -inf, %v1118
        %v1138 = vsel %vm1128, -inf, %v1119
        %v1139 = vsel %vm1128, -inf, %v1120
        %v1140 = vsel %vm1128, -inf, %v1121
        %v1141 = vsel %vm1128, -inf, %v1122
        %v1142 = vsel %vm1128, -inf, %v1123
        %v1143 = vsel %vm1128, -inf, %v1124
        %v1144 = vsel %vm1128, -inf, %v1125
        %1145 = vmax.xlane.f32.xlu0 %v1129
        %v1146 = vpop.xlane.xlu0 %1145
        %1147 = vmax.xlane.f32.xlu0 %v1130
        %v1148 = vpop.xlane.xlu0 %1147
        %1149 = vmax.xlane.f32.xlu0 %v1131
        %v1150 = vpop.xlane.xlu0 %1149
        %1151 = vmax.xlane.f32.xlu0 %v1132
        %v1152 = vpop.xlane.xlu0 %1151
        %1153 = vmax.xlane.f32.xlu0 %v1133
        %v1154 = vpop.xlane.xlu0 %1153
        %1155 = vmax.xlane.f32.xlu0 %v1134
        %v1156 = vpop.xlane.xlu0 %1155
        %1157 = vmax.xlane.f32.xlu0 %v1135
        %v1158 = vpop.xlane.xlu0 %1157
        %1159 = vmax.xlane.f32.xlu0 %v1136
        %v1160 = vpop.xlane.xlu0 %1159
        %1161 = vmax.xlane.f32.xlu0 %v1137
        %v1162 = vpop.xlane.xlu0 %1161
        %1163 = vmax.xlane.f32.xlu0 %v1138
        %v1164 = vpop.xlane.xlu0 %1163
        %1165 = vmax.xlane.f32.xlu0 %v1139
        %v1166 = vpop.xlane.xlu0 %1165
        %1167 = vmax.xlane.f32.xlu0 %v1140
        %v1168 = vpop.xlane.xlu0 %1167
        %1169 = vmax.xlane.f32.xlu0 %v1141
        %v1170 = vpop.xlane.xlu0 %1169
        %1171 = vmax.xlane.f32.xlu0 %v1142
        %v1172 = vpop.xlane.xlu0 %1171
        %1173 = vmax.xlane.f32.xlu0 %v1143
        %v1174 = vpop.xlane.xlu0 %1173
        %1175 = vmax.xlane.f32.xlu0 %v1144
        %v1176 = vpop.xlane.xlu0 %1175
        %v1177 = vsub.f32 %v1129, %v1146
        %v1178 = vsub.f32 %v1130, %v1148
        %v1179 = vsub.f32 %v1131, %v1150
        %v1180 = vsub.f32 %v1132, %v1152
        %v1181 = vsub.f32 %v1133, %v1154
        %v1182 = vsub.f32 %v1134, %v1156
        %v1183 = vsub.f32 %v1135, %v1158
        %v1184 = vsub.f32 %v1136, %v1160
        %v1185 = vsub.f32 %v1137, %v1162
        %v1186 = vsub.f32 %v1138, %v1164
        %v1187 = vsub.f32 %v1139, %v1166
        %v1188 = vsub.f32 %v1140, %v1168
        %v1189 = vsub.f32 %v1141, %v1170
        %v1190 = vsub.f32 %v1142, %v1172
        %v1191 = vsub.f32 %v1143, %v1174
        %v1192 = vsub.f32 %v1144, %v1176
        %v1193 = vmul.f32 %v1177, 1.442695
        %v1194 = vpow.pop %v1193
        %v1195 = vmul.f32 %v1178, 1.442695
        %v1196 = vpow.pop %v1195
        %v1197 = vmul.f32 %v1179, 1.442695
        %v1198 = vpow.pop %v1197
        %v1199 = vmul.f32 %v1180, 1.442695
        %v1200 = vpow.pop %v1199
        %v1201 = vmul.f32 %v1181, 1.442695
        %v1202 = vpow.pop %v1201
        %v1203 = vmul.f32 %v1182, 1.442695
        %v1204 = vpow.pop %v1203
        %v1205 = vmul.f32 %v1183, 1.442695
        %v1206 = vpow.pop %v1205
        %v1207 = vmul.f32 %v1184, 1.442695
        %v1208 = vpow.pop %v1207
        %v1209 = vmul.f32 %v1185, 1.442695
        %v1210 = vpow.pop %v1209
        %v1211 = vmul.f32 %v1186, 1.442695
        %v1212 = vpow.pop %v1211
        %v1213 = vmul.f32 %v1187, 1.442695
        %v1214 = vpow.pop %v1213
        %v1215 = vmul.f32 %v1188, 1.442695
        %v1216 = vpow.pop %v1215
        %v1217 = vmul.f32 %v1189, 1.442695
        %v1218 = vpow.pop %v1217
        %v1219 = vmul.f32 %v1190, 1.442695
        %v1220 = vpow.pop %v1219
        %v1221 = vmul.f32 %v1191, 1.442695
        %v1222 = vpow.pop %v1221
        %v1223 = vmul.f32 %v1192, 1.442695
        %v1224 = vpow.pop %v1223
        %1225 = vadd.xlane.f32.xlu0 %v1194
        %v1226 = vpop.xlane.xlu0 %1225
        %1227 = vadd.xlane.f32.xlu0 %v1196
        %v1228 = vpop.xlane.xlu0 %1227
        %1229 = vadd.xlane.f32.xlu0 %v1198
        %v1230 = vpop.xlane.xlu0 %1229
        %1231 = vadd.xlane.f32.xlu0 %v1200
        %v1232 = vpop.xlane.xlu0 %1231
        %1233 = vadd.xlane.f32.xlu0 %v1202
        %v1234 = vpop.xlane.xlu0 %1233
        %1235 = vadd.xlane.f32.xlu0 %v1204
        %v1236 = vpop.xlane.xlu0 %1235
        %1237 = vadd.xlane.f32.xlu0 %v1206
        %v1238 = vpop.xlane.xlu0 %1237
        %1239 = vadd.xlane.f32.xlu0 %v1208
        %v1240 = vpop.xlane.xlu0 %1239
        %1241 = vadd.xlane.f32.xlu0 %v1210
        %v1242 = vpop.xlane.xlu0 %1241
        %1243 = vadd.xlane.f32.xlu0 %v1212
        %v1244 = vpop.xlane.xlu0 %1243
        %1245 = vadd.xlane.f32.xlu0 %v1214
        %v1246 = vpop.xlane.xlu0 %1245
        %1247 = vadd.xlane.f32.xlu0 %v1216
        %v1248 = vpop.xlane.xlu0 %1247
        %1249 = vadd.xlane.f32.xlu0 %v1218
        %v1250 = vpop.xlane.xlu0 %1249
        %1251 = vadd.xlane.f32.xlu0 %v1220
        %v1252 = vpop.xlane.xlu0 %1251
        %1253 = vadd.xlane.f32.xlu0 %v1222
        %v1254 = vpop.xlane.xlu0 %1253
        %1255 = vadd.xlane.f32.xlu0 %v1224
        %v1256 = vpop.xlane.xlu0 %1255
        %v1257 = vrcp.pop %v1226
        %v1258 = vrcp.pop %v1228
        %v1259 = vrcp.pop %v1230
        %v1260 = vrcp.pop %v1232
        %v1261 = vrcp.pop %v1234
        %v1262 = vrcp.pop %v1236
        %v1263 = vrcp.pop %v1238
        %v1264 = vrcp.pop %v1240
        %v1265 = vrcp.pop %v1242
        %v1266 = vrcp.pop %v1244
        %v1267 = vrcp.pop %v1246
        %v1268 = vrcp.pop %v1248
        %v1269 = vrcp.pop %v1250
        %v1270 = vrcp.pop %v1252
        %v1271 = vrcp.pop %v1254
        %v1272 = vrcp.pop %v1256
        %v1273 = vmul.f32 %v1194, %v1257
        %v1274 = vmul.f32 %v1196, %v1258
        %v1275 = vmul.f32 %v1198, %v1259
        %v1276 = vmul.f32 %v1200, %v1260
        %v1277 = vmul.f32 %v1202, %v1261
        %v1278 = vmul.f32 %v1204, %v1262
        %v1279 = vmul.f32 %v1206, %v1263
        %v1280 = vmul.f32 %v1208, %v1264
        %v1281 = vmul.f32 %v1210, %v1265
        %v1282 = vmul.f32 %v1212, %v1266
        %v1283 = vmul.f32 %v1214, %v1267
        %v1284 = vmul.f32 %v1216, %v1268
        %v1285 = vmul.f32 %v1218, %v1269
        %v1286 = vmul.f32 %v1220, %v1270
        %v1287 = vmul.f32 %v1222, %v1271
        %v1288 = vmul.f32 %v1224, %v1272
        %v1289 = vpack.c.bf16 %v1274, %v1273
        %v1290 = vpack.c.bf16 %v1276, %v1275
        %v1291 = vpack.c.bf16 %v1278, %v1277
        %v1292 = vpack.c.bf16 %v1280, %v1279
        %v1293 = vpack.c.bf16 %v1282, %v1281
        %v1294 = vpack.c.bf16 %v1284, %v1283
        %v1295 = vpack.c.bf16 %v1286, %v1285
        %v1296 = vpack.c.bf16 %v1288, %v1287
        %v1297 = vld [vmem:[%s6] sm:$0xff]
        %v1298 = vld [vmem:[%s6 + $0x8] sm:$0xff]
        %v1299 = vld [vmem:[%s6 + $0x10] sm:$0xff]
        %v1300 = vld [vmem:[%s6 + $0x18] sm:$0xff]
        %v1301 = vld [vmem:[%s6 + $0x20] sm:$0xff]
        %v1302 = vld [vmem:[%s6 + $0x28] sm:$0xff]
        %v1303 = vld [vmem:[%s6 + $0x30] sm:$0xff]
        %v1304 = vld [vmem:[%s6 + $0x38] sm:$0xff]
        %v1305 = vld [vmem:[%s6 + $0x40] sm:$0xff]
        %v1306 = vld [vmem:[%s6 + $0x48] sm:$0xff]
        %v1307 = vld [vmem:[%s6 + $0x50] sm:$0xff]
        %v1308 = vld [vmem:[%s6 + $0x58] sm:$0xff]
        %v1309 = vld [vmem:[%s6 + $0x60] sm:$0xff]
        %v1310 = vld [vmem:[%s6 + $0x68] sm:$0xff]
        %v1311 = vld [vmem:[%s6 + $0x70] sm:$0xff]
        %v1312 = vld [vmem:[%s6 + $0x78] sm:$0xff]
        %v1313 = vld [vmem:[%s7] sm:$0x3]
        %v1315 = vlaneseq
        %v1316 = vshrl.u32 %v1315, 7
        %v1317 = vsub.s32 0, %v1316
        %v1318 = vrot.slane %v1313, %v1317
        %v1319 = vlaneseq
        %v1320 = vshrl.u32 %v1319, 7
        %v1321 = vsub.s32 1, %v1320
        %v1322 = vrot.slane %v1313, %v1321
        %v1341 = vunpack.c.l.b16 %v1297
        %v1342 = vunpack.c.h.b16 %v1297
        %v1343 = vunpack.c.l.b16 %v1298
        %v1344 = vunpack.c.h.b16 %v1298
        %v1345 = vunpack.c.l.b16 %v1299
        %v1346 = vunpack.c.h.b16 %v1299
        %v1347 = vunpack.c.l.b16 %v1300
        %v1348 = vunpack.c.h.b16 %v1300
        %v1349 = vunpack.c.l.b16 %v1301
        %v1350 = vunpack.c.h.b16 %v1301
        %v1351 = vunpack.c.l.b16 %v1302
        %v1352 = vunpack.c.h.b16 %v1302
        %v1353 = vunpack.c.l.b16 %v1303
        %v1354 = vunpack.c.h.b16 %v1303
        %v1355 = vunpack.c.l.b16 %v1304
        %v1356 = vunpack.c.h.b16 %v1304
        %v1357 = vunpack.c.l.b16 %v1305
        %v1358 = vunpack.c.h.b16 %v1305
        %v1359 = vunpack.c.l.b16 %v1306
        %v1360 = vunpack.c.h.b16 %v1306
        %v1361 = vunpack.c.l.b16 %v1307
        %v1362 = vunpack.c.h.b16 %v1307
        %v1363 = vunpack.c.l.b16 %v1308
        %v1364 = vunpack.c.h.b16 %v1308
        %v1365 = vunpack.c.l.b16 %v1309
        %v1366 = vunpack.c.h.b16 %v1309
        %v1367 = vunpack.c.l.b16 %v1310
        %v1368 = vunpack.c.h.b16 %v1310
        %v1369 = vunpack.c.l.b16 %v1311
        %v1370 = vunpack.c.h.b16 %v1311
        %v1371 = vunpack.c.l.b16 %v1312
        %v1372 = vunpack.c.h.b16 %v1312
        %v1373 = vpack.c.b16 %v1343, %v1341
        %v1374 = vpack.c.b16 %v1344, %v1342
        %v1375 = vpack.c.b16 %v1347, %v1345
        %v1376 = vpack.c.b16 %v1348, %v1346
        %v1377 = vpack.c.b16 %v1351, %v1349
        %v1378 = vpack.c.b16 %v1352, %v1350
        %v1379 = vpack.c.b16 %v1355, %v1353
        %v1380 = vpack.c.b16 %v1356, %v1354
        %v1381 = vpack.c.b16 %v1359, %v1357
        %v1382 = vpack.c.b16 %v1360, %v1358
        %v1383 = vpack.c.b16 %v1363, %v1361
        %v1384 = vpack.c.b16 %v1364, %v1362
        %v1385 = vpack.c.b16 %v1367, %v1365
        %v1386 = vpack.c.b16 %v1368, %v1366
        %v1387 = vpack.c.b16 %v1371, %v1369
        %v1388 = vpack.c.b16 %v1372, %v1370
        %1405 = vmatprep.subr.bf16.mxu0 %v1374
        %1406 = vmatpush1.bf16.msra.mxu0 %v1373
        %1407 = vmatprep.subr.bf16.mxu0 %v1376
        %1408 = vmatpush1.bf16.msra.mxu0 %v1375
        %1409 = vmatprep.subr.bf16.mxu0 %v1378
        %1410 = vmatpush1.bf16.msra.mxu0 %v1377
        %1411 = vmatprep.subr.bf16.mxu0 %v1380
        %1412 = vmatpush1.bf16.msra.mxu0 %v1379
        %1413 = vmatprep.subr.bf16.mxu0 %v1382
        %1414 = vmatpush1.bf16.msra.mxu0 %v1381
        %1415 = vmatprep.subr.bf16.mxu0 %v1384
        %1416 = vmatpush1.bf16.msra.mxu0 %v1383
        %1417 = vmatprep.subr.bf16.mxu0 %v1386
        %1418 = vmatpush1.bf16.msra.mxu0 %v1385
        %1419 = vmatprep.subr.bf16.mxu0 %v1388
        %1420 = vmatpush1.bf16.msra.mxu0 %v1387
        %1421 = vmatprep.subr.bf16.mxu0 0
        %1422 = vmatpush1.bf16.msra.mxu0 0
        %1423 = vmatprep.subr.bf16.mxu0 0
        %1424 = vmatpush1.bf16.msra.mxu0 0
        %1425 = vmatprep.subr.bf16.mxu0 0
        %1426 = vmatpush1.bf16.msra.mxu0 0
        %1427 = vmatprep.subr.bf16.mxu0 0
        %1428 = vmatpush1.bf16.msra.mxu0 0
        %1429 = vmatprep.subr.bf16.mxu0 0
        %1430 = vmatpush1.bf16.msra.mxu0 0
        %1431 = vmatprep.subr.bf16.mxu0 0
        %1432 = vmatpush1.bf16.msra.mxu0 0
        %1433 = vmatprep.subr.bf16.mxu0 0
        %1434 = vmatpush1.bf16.msra.mxu0 0
        %1435 = vmatprep.subr.bf16.mxu0 0
        %1436 = vmatpush1.bf16.msra.mxu0 0
        %1437 = vmatprep.mubr.bf16.mxu0 0
        %1438 = vmatmul.mubr.bf16.gmra.mrb[0].mxu0 %v1289
        %v1439 = vpop.f32.mrb[0].mxu0
        %v1440 = vadd.f32 %v1318, %v1439
        %v1441 = vpop.f32.mrb[0].mxu0
        %v1442 = vadd.f32 %v1322, %v1441
        %v1443 = vpop.f32.mrb[0].mxu0
        %v1444 = vadd.f32 %v1318, %v1443
        %v1445 = vpop.f32.mrb[0].mxu0
        %v1446 = vadd.f32 %v1322, %v1445
        %1447 = vmatprep.mubr.bf16.mxu0 0
        %1448 = vmatmul.mubr.bf16.gmra.mrb[0].mxu0 %v1290
        %v1449 = vpop.f32.mrb[0].mxu0
        %v1450 = vadd.f32 %v1318, %v1449
        %v1451 = vpop.f32.mrb[0].mxu0
        %v1452 = vadd.f32 %v1322, %v1451
        %v1453 = vpop.f32.mrb[0].mxu0
        %v1454 = vadd.f32 %v1318, %v1453
        %v1455 = vpop.f32.mrb[0].mxu0
        %v1456 = vadd.f32 %v1322, %v1455
        %1457 = vmatprep.mubr.bf16.mxu0 0
        %1458 = vmatmul.mubr.bf16.gmra.mrb[0].mxu0 %v1291
        %v1459 = vpop.f32.mrb[0].mxu0
        %v1460 = vadd.f32 %v1318, %v1459
        %v1461 = vpop.f32.mrb[0].mxu0
        %v1462 = vadd.f32 %v1322, %v1461
        %v1463 = vpop.f32.mrb[0].mxu0
        %v1464 = vadd.f32 %v1318, %v1463
        %v1465 = vpop.f32.mrb[0].mxu0
        %v1466 = vadd.f32 %v1322, %v1465
        %1467 = vmatprep.mubr.bf16.mxu0 0
        %1468 = vmatmul.mubr.bf16.gmra.mrb[0].mxu0 %v1292
        %v1469 = vpop.f32.mrb[0].mxu0
        %v1470 = vadd.f32 %v1318, %v1469
        %v1471 = vpop.f32.mrb[0].mxu0
        %v1472 = vadd.f32 %v1322, %v1471
        %v1473 = vpop.f32.mrb[0].mxu0
        %v1474 = vadd.f32 %v1318, %v1473
        %v1475 = vpop.f32.mrb[0].mxu0
        %v1476 = vadd.f32 %v1322, %v1475
        %1477 = vmatprep.mubr.bf16.mxu0 0
        %1478 = vmatmul.mubr.bf16.gmra.mrb[0].mxu0 %v1293
        %v1479 = vpop.f32.mrb[0].mxu0
        %v1480 = vadd.f32 %v1318, %v1479
        %v1481 = vpop.f32.mrb[0].mxu0
        %v1482 = vadd.f32 %v1322, %v1481
        %v1483 = vpop.f32.mrb[0].mxu0
        %v1484 = vadd.f32 %v1318, %v1483
        %v1485 = vpop.f32.mrb[0].mxu0
        %v1486 = vadd.f32 %v1322, %v1485
        %1487 = vmatprep.mubr.bf16.mxu0 0
        %1488 = vmatmul.mubr.bf16.gmra.mrb[0].mxu0 %v1294
        %v1489 = vpop.f32.mrb[0].mxu0
        %v1490 = vadd.f32 %v1318, %v1489
        %v1491 = vpop.f32.mrb[0].mxu0
        %v1492 = vadd.f32 %v1322, %v1491
        %v1493 = vpop.f32.mrb[0].mxu0
        %v1494 = vadd.f32 %v1318, %v1493
        %v1495 = vpop.f32.mrb[0].mxu0
        %v1496 = vadd.f32 %v1322, %v1495
        %1497 = vmatprep.mubr.bf16.mxu0 0
        %1498 = vmatmul.mubr.bf16.gmra.mrb[0].mxu0 %v1295
        %v1499 = vpop.f32.mrb[0].mxu0
        %v1500 = vadd.f32 %v1318, %v1499
        %v1501 = vpop.f32.mrb[0].mxu0
        %v1502 = vadd.f32 %v1322, %v1501
        %v1503 = vpop.f32.mrb[0].mxu0
        %v1504 = vadd.f32 %v1318, %v1503
        %v1505 = vpop.f32.mrb[0].mxu0
        %v1506 = vadd.f32 %v1322, %v1505
        %1507 = vmatprep.mubr.bf16.mxu0 0
        %1508 = vmatmul.mubr.bf16.gmra.mrb[0].mxu0 %v1296
        %v1509 = vpop.f32.mrb[0].mxu0
        %v1510 = vadd.f32 %v1318, %v1509
        %v1511 = vpop.f32.mrb[0].mxu0
        %v1512 = vadd.f32 %v1322, %v1511
        %v1513 = vpop.f32.mrb[0].mxu0
        %v1514 = vadd.f32 %v1318, %v1513
        %v1515 = vpop.f32.mrb[0].mxu0
        %v1516 = vadd.f32 %v1322, %v1515
        %1517 = vdwg.mxu0
        %v1518 = vmax.f32 %v1440, %v1442
        %1519 = vmax.xlane.f32.xlu0 %v1518
        %v1520 = vpop.xlane.xlu0 %1519
        %v1521 = vmax.f32 %v1444, %v1446
        %1522 = vmax.xlane.f32.xlu0 %v1521
        %v1523 = vpop.xlane.xlu0 %1522
        %v1524 = vmax.f32 %v1450, %v1452
        %1525 = vmax.xlane.f32.xlu0 %v1524
        %v1526 = vpop.xlane.xlu0 %1525
        %v1527 = vmax.f32 %v1454, %v1456
        %1528 = vmax.xlane.f32.xlu0 %v1527
        %v1529 = vpop.xlane.xlu0 %1528
        %v1530 = vmax.f32 %v1460, %v1462
        %1531 = vmax.xlane.f32.xlu0 %v1530
        %v1532 = vpop.xlane.xlu0 %1531
        %v1533 = vmax.f32 %v1464, %v1466
        %1534 = vmax.xlane.f32.xlu0 %v1533
        %v1535 = vpop.xlane.xlu0 %1534
        %v1536 = vmax.f32 %v1470, %v1472
        %1537 = vmax.xlane.f32.xlu0 %v1536
        %v1538 = vpop.xlane.xlu0 %1537
        %v1539 = vmax.f32 %v1474, %v1476
        %1540 = vmax.xlane.f32.xlu0 %v1539
        %v1541 = vpop.xlane.xlu0 %1540
        %v1542 = vmax.f32 %v1480, %v1482
        %1543 = vmax.xlane.f32.xlu0 %v1542
        %v1544 = vpop.xlane.xlu0 %1543
        %v1545 = vmax.f32 %v1484, %v1486
        %1546 = vmax.xlane.f32.xlu0 %v1545
        %v1547 = vpop.xlane.xlu0 %1546
        %v1548 = vmax.f32 %v1490, %v1492
        %1549 = vmax.xlane.f32.xlu0 %v1548
        %v1550 = vpop.xlane.xlu0 %1549
        %v1551 = vmax.f32 %v1494, %v1496
        %1552 = vmax.xlane.f32.xlu0 %v1551
        %v1553 = vpop.xlane.xlu0 %1552
        %v1554 = vmax.f32 %v1500, %v1502
        %1555 = vmax.xlane.f32.xlu0 %v1554
        %v1556 = vpop.xlane.xlu0 %1555
        %v1557 = vmax.f32 %v1504, %v1506
        %1558 = vmax.xlane.f32.xlu0 %v1557
        %v1559 = vpop.xlane.xlu0 %1558
        %v1560 = vmax.f32 %v1510, %v1512
        %1561 = vmax.xlane.f32.xlu0 %v1560
        %v1562 = vpop.xlane.xlu0 %1561
        %v1563 = vmax.f32 %v1514, %v1516
        %1564 = vmax.xlane.f32.xlu0 %v1563
        %v1565 = vpop.xlane.xlu0 %1564
        %v1566 = vmax.f32 %v1520, -1e+30
        %v1567 = vmax.f32 %v1523, -1e+30
        %v1568 = vmax.f32 %v1526, -1e+30
        %v1569 = vmax.f32 %v1529, -1e+30
        %v1570 = vmax.f32 %v1532, -1e+30
        %v1571 = vmax.f32 %v1535, -1e+30
        %v1572 = vmax.f32 %v1538, -1e+30
        %v1573 = vmax.f32 %v1541, -1e+30
        %v1574 = vmax.f32 %v1544, -1e+30
        %v1575 = vmax.f32 %v1547, -1e+30
        %v1576 = vmax.f32 %v1550, -1e+30
        %v1577 = vmax.f32 %v1553, -1e+30
        %v1578 = vmax.f32 %v1556, -1e+30
        %v1579 = vmax.f32 %v1559, -1e+30
        %v1580 = vmax.f32 %v1562, -1e+30
        %v1581 = vmax.f32 %v1565, -1e+30
        %v1582 = vsub.f32 -1e+30, %v1566
        %v1583 = vsub.f32 -1e+30, %v1567
        %v1584 = vsub.f32 -1e+30, %v1568
        %v1585 = vsub.f32 -1e+30, %v1569
        %v1586 = vsub.f32 -1e+30, %v1570
        %v1587 = vsub.f32 -1e+30, %v1571
        %v1588 = vsub.f32 -1e+30, %v1572
        %v1589 = vsub.f32 -1e+30, %v1573
        %v1590 = vsub.f32 -1e+30, %v1574
        %v1591 = vsub.f32 -1e+30, %v1575
        %v1592 = vsub.f32 -1e+30, %v1576
        %v1593 = vsub.f32 -1e+30, %v1577
        %v1594 = vsub.f32 -1e+30, %v1578
        %v1595 = vsub.f32 -1e+30, %v1579
        %v1596 = vsub.f32 -1e+30, %v1580
        %v1597 = vsub.f32 -1e+30, %v1581
        %v1598 = vmul.f32 %v1582, 1.442695
        %v1599 = vpow.pop %v1598
        %v1600 = vmul.f32 %v1583, 1.442695
        %v1601 = vpow.pop %v1600
        %v1602 = vmul.f32 %v1584, 1.442695
        %v1603 = vpow.pop %v1602
        %v1604 = vmul.f32 %v1585, 1.442695
        %v1605 = vpow.pop %v1604
        %v1606 = vmul.f32 %v1586, 1.442695
        %v1607 = vpow.pop %v1606
        %v1608 = vmul.f32 %v1587, 1.442695
        %v1609 = vpow.pop %v1608
        %v1610 = vmul.f32 %v1588, 1.442695
        %v1611 = vpow.pop %v1610
        %v1612 = vmul.f32 %v1589, 1.442695
        %v1613 = vpow.pop %v1612
        %v1614 = vmul.f32 %v1590, 1.442695
        %v1615 = vpow.pop %v1614
        %v1616 = vmul.f32 %v1591, 1.442695
        %v1617 = vpow.pop %v1616
        %v1618 = vmul.f32 %v1592, 1.442695
        %v1619 = vpow.pop %v1618
        %v1620 = vmul.f32 %v1593, 1.442695
        %v1621 = vpow.pop %v1620
        %v1622 = vmul.f32 %v1594, 1.442695
        %v1623 = vpow.pop %v1622
        %v1624 = vmul.f32 %v1595, 1.442695
        %v1625 = vpow.pop %v1624
        %v1626 = vmul.f32 %v1596, 1.442695
        %v1627 = vpow.pop %v1626
        %v1628 = vmul.f32 %v1597, 1.442695
        %v1629 = vpow.pop %v1628
        %v1630 = vmul.f32 %v1599, 0.0
        %v1631 = vmul.f32 %v1601, 0.0
        %v1632 = vmul.f32 %v1603, 0.0
        %v1633 = vmul.f32 %v1605, 0.0
        %v1634 = vmul.f32 %v1607, 0.0
        %v1635 = vmul.f32 %v1609, 0.0
        %v1636 = vmul.f32 %v1611, 0.0
        %v1637 = vmul.f32 %v1613, 0.0
        %v1638 = vmul.f32 %v1615, 0.0
        %v1639 = vmul.f32 %v1617, 0.0
        %v1640 = vmul.f32 %v1619, 0.0
        %v1641 = vmul.f32 %v1621, 0.0
        %v1642 = vmul.f32 %v1623, 0.0
        %v1643 = vmul.f32 %v1625, 0.0
        %v1644 = vmul.f32 %v1627, 0.0
        %v1645 = vmul.f32 %v1629, 0.0
        %v1646 = vsub.f32 %v1440, %v1566
        %v1647 = vsub.f32 %v1442, %v1566
        %v1648 = vsub.f32 %v1444, %v1567
        %v1649 = vsub.f32 %v1446, %v1567
        %v1650 = vsub.f32 %v1450, %v1568
        %v1651 = vsub.f32 %v1452, %v1568
        %v1652 = vsub.f32 %v1454, %v1569
        %v1653 = vsub.f32 %v1456, %v1569
        %v1654 = vsub.f32 %v1460, %v1570
        %v1655 = vsub.f32 %v1462, %v1570
        %v1656 = vsub.f32 %v1464, %v1571
        %v1657 = vsub.f32 %v1466, %v1571
        %v1658 = vsub.f32 %v1470, %v1572
        %v1659 = vsub.f32 %v1472, %v1572
        %v1660 = vsub.f32 %v1474, %v1573
        %v1661 = vsub.f32 %v1476, %v1573
        %v1662 = vsub.f32 %v1480, %v1574
        %v1663 = vsub.f32 %v1482, %v1574
        %v1664 = vsub.f32 %v1484, %v1575
        %v1665 = vsub.f32 %v1486, %v1575
        %v1666 = vsub.f32 %v1490, %v1576
        %v1667 = vsub.f32 %v1492, %v1576
        %v1668 = vsub.f32 %v1494, %v1577
        %v1669 = vsub.f32 %v1496, %v1577
        %v1670 = vsub.f32 %v1500, %v1578
        %v1671 = vsub.f32 %v1502, %v1578
        %v1672 = vsub.f32 %v1504, %v1579
        %v1673 = vsub.f32 %v1506, %v1579
        %v1674 = vsub.f32 %v1510, %v1580
        %v1675 = vsub.f32 %v1512, %v1580
        %v1676 = vsub.f32 %v1514, %v1581
        %v1677 = vsub.f32 %v1516, %v1581
        %v1678 = vmul.f32 %v1646, 1.442695
        %v1679 = vpow.pop %v1678
        %v1680 = vmul.f32 %v1647, 1.442695
        %v1681 = vpow.pop %v1680
        %v1682 = vmul.f32 %v1648, 1.442695
        %v1683 = vpow.pop %v1682
        %v1684 = vmul.f32 %v1649, 1.442695
        %v1685 = vpow.pop %v1684
        %v1686 = vmul.f32 %v1650, 1.442695
        %v1687 = vpow.pop %v1686
        %v1688 = vmul.f32 %v1651, 1.442695
        %v1689 = vpow.pop %v1688
        %v1690 = vmul.f32 %v1652, 1.442695
        %v1691 = vpow.pop %v1690
        %v1692 = vmul.f32 %v1653, 1.442695
        %v1693 = vpow.pop %v1692
        %v1694 = vmul.f32 %v1654, 1.442695
        %v1695 = vpow.pop %v1694
        %v1696 = vmul.f32 %v1655, 1.442695
        %v1697 = vpow.pop %v1696
        %v1698 = vmul.f32 %v1656, 1.442695
        %v1699 = vpow.pop %v1698
        %v1700 = vmul.f32 %v1657, 1.442695
        %v1701 = vpow.pop %v1700
        %v1702 = vmul.f32 %v1658, 1.442695
        %v1703 = vpow.pop %v1702
        %v1704 = vmul.f32 %v1659, 1.442695
        %v1705 = vpow.pop %v1704
        %v1706 = vmul.f32 %v1660, 1.442695
        %v1707 = vpow.pop %v1706
        %v1708 = vmul.f32 %v1661, 1.442695
        %v1709 = vpow.pop %v1708
        %v1710 = vmul.f32 %v1662, 1.442695
        %v1711 = vpow.pop %v1710
        %v1712 = vmul.f32 %v1663, 1.442695
        %v1713 = vpow.pop %v1712
        %v1714 = vmul.f32 %v1664, 1.442695
        %v1715 = vpow.pop %v1714
        %v1716 = vmul.f32 %v1665, 1.442695
        %v1717 = vpow.pop %v1716
        %v1718 = vmul.f32 %v1666, 1.442695
        %v1719 = vpow.pop %v1718
        %v1720 = vmul.f32 %v1667, 1.442695
        %v1721 = vpow.pop %v1720
        %v1722 = vmul.f32 %v1668, 1.442695
        %v1723 = vpow.pop %v1722
        %v1724 = vmul.f32 %v1669, 1.442695
        %v1725 = vpow.pop %v1724
        %v1726 = vmul.f32 %v1670, 1.442695
        %v1727 = vpow.pop %v1726
        %v1728 = vmul.f32 %v1671, 1.442695
        %v1729 = vpow.pop %v1728
        %v1730 = vmul.f32 %v1672, 1.442695
        %v1731 = vpow.pop %v1730
        %v1732 = vmul.f32 %v1673, 1.442695
        %v1733 = vpow.pop %v1732
        %v1734 = vmul.f32 %v1674, 1.442695
        %v1735 = vpow.pop %v1734
        %v1736 = vmul.f32 %v1675, 1.442695
        %v1737 = vpow.pop %v1736
        %v1738 = vmul.f32 %v1676, 1.442695
        %v1739 = vpow.pop %v1738
        %v1740 = vmul.f32 %v1677, 1.442695
        %v1741 = vpow.pop %v1740
        %v1742 = vadd.f32 %v1679, %v1681
        %1743 = vadd.xlane.f32.xlu0 %v1742
        %v1744 = vpop.xlane.xlu0 %1743
        %v1745 = vadd.f32 %v1683, %v1685
        %1746 = vadd.xlane.f32.xlu0 %v1745
        %v1747 = vpop.xlane.xlu0 %1746
        %v1748 = vadd.f32 %v1687, %v1689
        %1749 = vadd.xlane.f32.xlu0 %v1748
        %v1750 = vpop.xlane.xlu0 %1749
        %v1751 = vadd.f32 %v1691, %v1693
        %1752 = vadd.xlane.f32.xlu0 %v1751
        %v1753 = vpop.xlane.xlu0 %1752
        %v1754 = vadd.f32 %v1695, %v1697
        %1755 = vadd.xlane.f32.xlu0 %v1754
        %v1756 = vpop.xlane.xlu0 %1755
        %v1757 = vadd.f32 %v1699, %v1701
        %1758 = vadd.xlane.f32.xlu0 %v1757
        %v1759 = vpop.xlane.xlu0 %1758
        %v1760 = vadd.f32 %v1703, %v1705
        %1761 = vadd.xlane.f32.xlu0 %v1760
        %v1762 = vpop.xlane.xlu0 %1761
        %v1763 = vadd.f32 %v1707, %v1709
        %1764 = vadd.xlane.f32.xlu0 %v1763
        %v1765 = vpop.xlane.xlu0 %1764
        %v1766 = vadd.f32 %v1711, %v1713
        %1767 = vadd.xlane.f32.xlu0 %v1766
        %v1768 = vpop.xlane.xlu0 %1767
        %v1769 = vadd.f32 %v1715, %v1717
        %1770 = vadd.xlane.f32.xlu0 %v1769
        %v1771 = vpop.xlane.xlu0 %1770
        %v1772 = vadd.f32 %v1719, %v1721
        %1773 = vadd.xlane.f32.xlu0 %v1772
        %v1774 = vpop.xlane.xlu0 %1773
        %v1775 = vadd.f32 %v1723, %v1725
        %1776 = vadd.xlane.f32.xlu0 %v1775
        %v1777 = vpop.xlane.xlu0 %1776
        %v1778 = vadd.f32 %v1727, %v1729
        %1779 = vadd.xlane.f32.xlu0 %v1778
        %v1780 = vpop.xlane.xlu0 %1779
        %v1781 = vadd.f32 %v1731, %v1733
        %1782 = vadd.xlane.f32.xlu0 %v1781
        %v1783 = vpop.xlane.xlu0 %1782
        %v1784 = vadd.f32 %v1735, %v1737
        %1785 = vadd.xlane.f32.xlu0 %v1784
        %v1786 = vpop.xlane.xlu0 %1785
        %v1787 = vadd.f32 %v1739, %v1741
        %1788 = vadd.xlane.f32.xlu0 %v1787
        %v1789 = vpop.xlane.xlu0 %1788
        %v1790 = vadd.f32 %v1630, %v1744
        %v1791 = vadd.f32 %v1631, %v1747
        %v1792 = vadd.f32 %v1632, %v1750
        %v1793 = vadd.f32 %v1633, %v1753
        %v1794 = vadd.f32 %v1634, %v1756
        %v1795 = vadd.f32 %v1635, %v1759
        %v1796 = vadd.f32 %v1636, %v1762
        %v1797 = vadd.f32 %v1637, %v1765
        %v1798 = vadd.f32 %v1638, %v1768
        %v1799 = vadd.f32 %v1639, %v1771
        %v1800 = vadd.f32 %v1640, %v1774
        %v1801 = vadd.f32 %v1641, %v1777
        %v1802 = vadd.f32 %v1642, %v1780
        %v1803 = vadd.f32 %v1643, %v1783
        %v1804 = vadd.f32 %v1644, %v1786
        %v1805 = vadd.f32 %v1645, %v1789
        %v1806 = vmul.f32 %v429, %v1440
        %v1807 = vmul.f32 %v430, %v1442
        %v1808 = vmul.f32 %v431, %v1444
        %v1809 = vmul.f32 %v432, %v1446
        %v1810 = vmul.f32 %v433, %v1450
        %v1811 = vmul.f32 %v434, %v1452
        %v1812 = vmul.f32 %v435, %v1454
        %v1813 = vmul.f32 %v436, %v1456
        %v1814 = vmul.f32 %v437, %v1460
        %v1815 = vmul.f32 %v438, %v1462
        %v1816 = vmul.f32 %v439, %v1464
        %v1817 = vmul.f32 %v440, %v1466
        %v1818 = vmul.f32 %v441, %v1470
        %v1819 = vmul.f32 %v442, %v1472
        %v1820 = vmul.f32 %v443, %v1474
        %v1821 = vmul.f32 %v444, %v1476
        %v1822 = vmul.f32 %v429, %v1480
        %v1823 = vmul.f32 %v430, %v1482
        %v1824 = vmul.f32 %v431, %v1484
        %v1825 = vmul.f32 %v432, %v1486
        %v1826 = vmul.f32 %v433, %v1490
        %v1827 = vmul.f32 %v434, %v1492
        %v1828 = vmul.f32 %v435, %v1494
        %v1829 = vmul.f32 %v436, %v1496
        %v1830 = vmul.f32 %v437, %v1500
        %v1831 = vmul.f32 %v438, %v1502
        %v1832 = vmul.f32 %v439, %v1504
        %v1833 = vmul.f32 %v440, %v1506
        %v1834 = vmul.f32 %v441, %v1510
        %v1835 = vmul.f32 %v442, %v1512
        %v1836 = vmul.f32 %v443, %v1514
        %v1837 = vmul.f32 %v444, %v1516
        %v1838 = vadd.f32 %v1806, %v1807
        %1839 = vadd.xlane.f32.xlu0 %v1838
        %v1840 = vpop.xlane.xlu0 %1839
        %v1841 = vadd.f32 %v1808, %v1809
        %1842 = vadd.xlane.f32.xlu0 %v1841
        %v1843 = vpop.xlane.xlu0 %1842
        %v1844 = vadd.f32 %v1810, %v1811
        %1845 = vadd.xlane.f32.xlu0 %v1844
        %v1846 = vpop.xlane.xlu0 %1845
        %v1847 = vadd.f32 %v1812, %v1813
        %1848 = vadd.xlane.f32.xlu0 %v1847
        %v1849 = vpop.xlane.xlu0 %1848
        %v1850 = vadd.f32 %v1814, %v1815
        %1851 = vadd.xlane.f32.xlu0 %v1850
        %v1852 = vpop.xlane.xlu0 %1851
        %v1853 = vadd.f32 %v1816, %v1817
        %1854 = vadd.xlane.f32.xlu0 %v1853
        %v1855 = vpop.xlane.xlu0 %1854
        %v1856 = vadd.f32 %v1818, %v1819
        %1857 = vadd.xlane.f32.xlu0 %v1856
        %v1858 = vpop.xlane.xlu0 %1857
        %v1859 = vadd.f32 %v1820, %v1821
        %1860 = vadd.xlane.f32.xlu0 %v1859
        %v1861 = vpop.xlane.xlu0 %1860
        %v1862 = vadd.f32 %v1822, %v1823
        %1863 = vadd.xlane.f32.xlu0 %v1862
        %v1864 = vpop.xlane.xlu0 %1863
        %v1865 = vadd.f32 %v1824, %v1825
        %1866 = vadd.xlane.f32.xlu0 %v1865
        %v1867 = vpop.xlane.xlu0 %1866
        %v1868 = vadd.f32 %v1826, %v1827
        %1869 = vadd.xlane.f32.xlu0 %v1868
        %v1870 = vpop.xlane.xlu0 %1869
        %v1871 = vadd.f32 %v1828, %v1829
        %1872 = vadd.xlane.f32.xlu0 %v1871
        %v1873 = vpop.xlane.xlu0 %1872
        %v1874 = vadd.f32 %v1830, %v1831
        %1875 = vadd.xlane.f32.xlu0 %v1874
        %v1876 = vpop.xlane.xlu0 %1875
        %v1877 = vadd.f32 %v1832, %v1833
        %1878 = vadd.xlane.f32.xlu0 %v1877
        %v1879 = vpop.xlane.xlu0 %1878
        %v1880 = vadd.f32 %v1834, %v1835
        %1881 = vadd.xlane.f32.xlu0 %v1880
        %v1882 = vpop.xlane.xlu0 %1881
        %v1883 = vadd.f32 %v1836, %v1837
        %1884 = vadd.xlane.f32.xlu0 %v1883
        %v1885 = vpop.xlane.xlu0 %1884
        %v1886 = vadd.f32 %v1840, 0.0
        %v1887 = vadd.f32 %v1843, 0.0
        %v1888 = vadd.f32 %v1846, 0.0
        %v1889 = vadd.f32 %v1849, 0.0
        %v1890 = vadd.f32 %v1852, 0.0
        %v1891 = vadd.f32 %v1855, 0.0
        %v1892 = vadd.f32 %v1858, 0.0
        %v1893 = vadd.f32 %v1861, 0.0
        %v1894 = vadd.f32 %v1864, 0.0
        %v1895 = vadd.f32 %v1867, 0.0
        %v1896 = vadd.f32 %v1870, 0.0
        %v1897 = vadd.f32 %v1873, 0.0
        %v1898 = vadd.f32 %v1876, 0.0
        %v1899 = vadd.f32 %v1879, 0.0
        %v1900 = vadd.f32 %v1882, 0.0
        %v1901 = vadd.f32 %v1885, 0.0
        %v1902 = vlog2.pop %v1790
        %v1903 = vmul.f32 %v1902, 0.6931472
        %v1904 = vlog2.pop %v1791
        %v1905 = vmul.f32 %v1904, 0.6931472
        %v1906 = vlog2.pop %v1792
        %v1907 = vmul.f32 %v1906, 0.6931472
        %v1908 = vlog2.pop %v1793
        %v1909 = vmul.f32 %v1908, 0.6931472
        %v1910 = vlog2.pop %v1794
        %v1911 = vmul.f32 %v1910, 0.6931472
        %v1912 = vlog2.pop %v1795
        %v1913 = vmul.f32 %v1912, 0.6931472
        %v1914 = vlog2.pop %v1796
        %v1915 = vmul.f32 %v1914, 0.6931472
        %v1916 = vlog2.pop %v1797
        %v1917 = vmul.f32 %v1916, 0.6931472
        %v1918 = vlog2.pop %v1798
        %v1919 = vmul.f32 %v1918, 0.6931472
        %v1920 = vlog2.pop %v1799
        %v1921 = vmul.f32 %v1920, 0.6931472
        %v1922 = vlog2.pop %v1800
        %v1923 = vmul.f32 %v1922, 0.6931472
        %v1924 = vlog2.pop %v1801
        %v1925 = vmul.f32 %v1924, 0.6931472
        %v1926 = vlog2.pop %v1802
        %v1927 = vmul.f32 %v1926, 0.6931472
        %v1928 = vlog2.pop %v1803
        %v1929 = vmul.f32 %v1928, 0.6931472
        %v1930 = vlog2.pop %v1804
        %v1931 = vmul.f32 %v1930, 0.6931472
        %v1932 = vlog2.pop %v1805
        %v1933 = vmul.f32 %v1932, 0.6931472
        %v1934 = vadd.f32 %v1566, %v1903
        %v1935 = vadd.f32 %v1567, %v1905
        %v1936 = vadd.f32 %v1568, %v1907
        %v1937 = vadd.f32 %v1569, %v1909
        %v1938 = vadd.f32 %v1570, %v1911
        %v1939 = vadd.f32 %v1571, %v1913
        %v1940 = vadd.f32 %v1572, %v1915
        %v1941 = vadd.f32 %v1573, %v1917
        %v1942 = vadd.f32 %v1574, %v1919
        %v1943 = vadd.f32 %v1575, %v1921
        %v1944 = vadd.f32 %v1576, %v1923
        %v1945 = vadd.f32 %v1577, %v1925
        %v1946 = vadd.f32 %v1578, %v1927
        %v1947 = vadd.f32 %v1579, %v1929
        %v1948 = vadd.f32 %v1580, %v1931
        %v1949 = vadd.f32 %v1581, %v1933
        %v1950 = vmul.f32 %v1934, %v1040
        %v1951 = vmul.f32 %v1935, %v1043
        %v1952 = vmul.f32 %v1936, %v1046
        %v1953 = vmul.f32 %v1937, %v1049
        %v1954 = vmul.f32 %v1938, %v1052
        %v1955 = vmul.f32 %v1939, %v1055
        %v1956 = vmul.f32 %v1940, %v1058
        %v1957 = vmul.f32 %v1941, %v1061
        %v1958 = vmul.f32 %v1942, %v1040
        %v1959 = vmul.f32 %v1943, %v1043
        %v1960 = vmul.f32 %v1944, %v1046
        %v1961 = vmul.f32 %v1945, %v1049
        %v1962 = vmul.f32 %v1946, %v1052
        %v1963 = vmul.f32 %v1947, %v1055
        %v1964 = vmul.f32 %v1948, %v1058
        %v1965 = vmul.f32 %v1949, %v1061
        %v1966 = vsub.f32 %v1886, %v1950
        %v1967 = vsub.f32 %v1887, %v1951
        %v1968 = vsub.f32 %v1888, %v1952
        %v1969 = vsub.f32 %v1889, %v1953
        %v1970 = vsub.f32 %v1890, %v1954
        %v1971 = vsub.f32 %v1891, %v1955
        %v1972 = vsub.f32 %v1892, %v1956
        %v1973 = vsub.f32 %v1893, %v1957
        %v1974 = vsub.f32 %v1894, %v1958
        %v1975 = vsub.f32 %v1895, %v1959
        %v1976 = vsub.f32 %v1896, %v1960
        %v1977 = vsub.f32 %v1897, %v1961
        %v1978 = vsub.f32 %v1898, %v1962
        %v1979 = vsub.f32 %v1899, %v1963
        %v1980 = vsub.f32 %v1900, %v1964
        %v1981 = vsub.f32 %v1901, %v1965
        %v1982 = vadd.f32 %v1966, %v1974
        %v1983 = vadd.f32 %v1967, %v1975
        %v1984 = vadd.f32 %v1968, %v1976
        %v1985 = vadd.f32 %v1969, %v1977
        %v1986 = vadd.f32 %v1970, %v1978
        %v1987 = vadd.f32 %v1971, %v1979
        %v1988 = vadd.f32 %v1972, %v1980
        %v1989 = vadd.f32 %v1973, %v1981
        %v1990 = vsub.f32 0.0, %v1982
        %v1991 = vsub.f32 0.0, %v1983
        %v1992 = vsub.f32 0.0, %v1984
        %v1993 = vsub.f32 0.0, %v1985
        %v1994 = vsub.f32 0.0, %v1986
        %v1995 = vsub.f32 0.0, %v1987
        %v1996 = vsub.f32 0.0, %v1988
        %v1997 = vsub.f32 0.0, %v1989
        %v1998 = vmul.f32 %v1990, 0.5
        %v1999 = vmul.f32 %v1991, 0.5
        %v2000 = vmul.f32 %v1992, 0.5
        %v2001 = vmul.f32 %v1993, 0.5
        %v2002 = vmul.f32 %v1994, 0.5
        %v2003 = vmul.f32 %v1995, 0.5
        %v2004 = vmul.f32 %v1996, 0.5
        %v2005 = vmul.f32 %v1997, 0.5
        %vm2006 = vcmask 7168
        %2007 = vst.msk [vmem:[%s426] sm:$0xff] %vm2006, %v1998
        %2008 = vst.msk [vmem:[%s426 + $0x8] sm:$0xff] %vm2006, %v1999
        %2009 = vst.msk [vmem:[%s426 + $0x10] sm:$0xff] %vm2006, %v2000
        %2010 = vst.msk [vmem:[%s426 + $0x18] sm:$0xff] %vm2006, %v2001
        %2011 = vst.msk [vmem:[%s426 + $0x20] sm:$0xff] %vm2006, %v2002
        %2012 = vst.msk [vmem:[%s426 + $0x28] sm:$0xff] %vm2006, %v2003
        %2013 = vst.msk [vmem:[%s426 + $0x30] sm:$0xff] %vm2006, %v2004
        %2014 = vst.msk [vmem:[%s426 + $0x38] sm:$0xff] %vm2006, %v2005
        %vm2015 = vcmask 15368
        %2016 = vst.msk [vmem:[%s426] sm:$0xff] %vm2015, %v1030
        %2017 = vst.msk [vmem:[%s426 + $0x8] sm:$0xff] %vm2015, %v1031
        %2018 = vst.msk [vmem:[%s426 + $0x10] sm:$0xff] %vm2015, %v1032
        %2019 = vst.msk [vmem:[%s426 + $0x18] sm:$0xff] %vm2015, %v1033
        %2020 = vst.msk [vmem:[%s426 + $0x20] sm:$0xff] %vm2015, %v1034
        %2021 = vst.msk [vmem:[%s426 + $0x28] sm:$0xff] %vm2015, %v1035
        %2022 = vst.msk [vmem:[%s426 + $0x30] sm:$0xff] %vm2015, %v1036
        %2023 = vst.msk [vmem:[%s426 + $0x38] sm:$0xff] %vm2015, %v1037
        %s2024 = smul.u32 8, %s19
        %p2025 = scmp.lt.s32.totalorder %s2024, 31
        %s2026 = scalar_select %p2025, %s2024, 31
        %s2027 = smul.addr %s2026, 8
        %s2028 = scalar_lea.vmem %s8, %s2027
        // Predicated region
        $region91: #{ntm_forward.1} parent=85 // pred_check
          %p2029 = pneg %p215
        $region92: #{ntm_forward.1} parent=85 // pred_check_branch
          %2031 = sbr.rel (%p2029) target = $region94
        $region93: #{ntm_forward.1} parent=85 // pred_region
          %s2032 = smul.u32 8, %s19
        $region94: #{ntm_forward.1} parent=85 // pred_fallthru
          _
      $region86: #{ntm_forward.1} parent=5 // pred_fallthru
        _
      %p2033 = scmp.le.s32.totalorder 2, %s14
      // Predicated region
      $region95: #{ntm_forward.1} parent=5 // pred_check
        %p2034 = pneg %p2033
      $region96: #{ntm_forward.1} parent=5 // pred_check_branch
        %2036 = sbr.rel (%p2034) target = $region98
      $region97: #{ntm_forward.1} parent=5 // pred_region
        %s2037 = ssub.s32 %s14, 2
        // Predicated region
        $region99: #{ntm_forward.1} parent=97 // pred_check
          %p2038 = pneg %p221
        $region100: #{ntm_forward.1} parent=97 // pred_check_branch
          %2040 = sbr.rel (%p2038) target = $region102
        $region101: #{ntm_forward.1} parent=97 // pred_region
          %s2041 = smul.u32 8, %s20
          %p2042 = scmp.lt.s32.totalorder %s2041, 31
          %s2043 = scalar_select %p2042, %s2041, 31
          %s2044 = smul.addr %s2043, 8
          %s2045 = scalar_lea.vmem %s8, %s2044
        $region102: #{ntm_forward.1} parent=97 // pred_fallthru
          _
      $region98: #{ntm_forward.1} parent=5 // pred_fallthru
        _
    $region6: #{ntm_forward.1} parent=1 // loop_footer
      %s18 = sadd.s32 1, %s14
    $region7: #{ntm_forward.1} parent=1 // loop_footer_branch
      %13 = sbr.rel target = $region3
    $region8: #{ntm_forward.1} parent=1 // loop_exit
      _

</llo_original>
